<compile_context>
chip_gen: v5e
topology: v5e:2x2
jax: 0.10.0
libtpu: 0.0.40
codegen_flags: <defaults>
</compile_context>

<pallas_src>
import numpy as np

import jax
import jax.numpy as jnp
from jax.experimental import pallas as pl
from jax.experimental.pallas import tpu as pltpu


EPS = 1e-5
KSIZE = 25      # conv2 kernel width
PAD = 12        # conv2 padding along W


def _pick_tile(total, target=2048, align=128):
    """Largest multiple of `align` that divides `total` and is <= target.
    Falls back to the full extent when `total` is small or unaligned, so the
    grid never has ragged tiles (keeps the fused BN2 stats exact)."""
    if total <= target or total % align != 0:
        return total
    best = align
    for t in range(align, target + 1, align):
        if total % t == 0:
            best = t
    return best


# --------------------------------------------------------------------------
# Kernel 1: fused BN1 + ReLU + 1x1 conv (channel-major) + BN2 partial stats
#   x_ref     : (1, C, TL)   one lane-tile of one sample, channels in sublanes
#   scale_ref : (C, 1)       gamma1 / sqrt(var1 + eps)
#   shift_ref : (C, 1)       beta1 - mean1 * scale1
#   w1_ref    : (IC, C)      1x1-conv weight
#   h_ref     : (1, IC, TL)  intermediate activation (channel-major)
#   ssum_ref  : (1, 1, IC, 1) per-channel sum of h over this tile
#   ssq_ref   : (1, 1, IC, 1) per-channel sum of h^2 over this tile
# --------------------------------------------------------------------------
def bn_relu_conv1x1_kernel(x_ref, scale_ref, shift_ref, w1_ref,
                           h_ref, ssum_ref, ssq_ref):
    xn = jnp.maximum(x_ref[0] * scale_ref[...] + shift_ref[...], 0.0)     # (C, TL)
    h = jnp.dot(w1_ref[...], xn, preferred_element_type=jnp.float32)      # (IC, TL)
    h_ref[0] = h
    # Fused BN2 partial statistics: avoids a second HBM pass over h.
    ssum_ref[0, 0] = jnp.sum(h, axis=1, keepdims=True)                    # (IC, 1)
    ssq_ref[0, 0] = jnp.sum(h * h, axis=1, keepdims=True)                 # (IC, 1)


# --------------------------------------------------------------------------
# Kernel 2: fused BN2 + ReLU + (1,25) conv along W + channel concat with x
#   x_ref     : (1, C, HW)    raw input channels (passed through to concat)
#   h_ref     : (1, IC, HW)   intermediate activation, HW = H*W in lanes
#   scale_ref : (IC, 1)
#   shift_ref : (IC, 1)
#   w2f_ref   : (G, K*IC)     conv2 weight flattened (row = k*IC + ic)
#   mask_ref  : (K, 1, HW)    1.0 where tap k is inside the row, else 0.0
#   o_ref     : (1, C+G, HW)  final output block (lane-dense)
#   col_ref   : VMEM scratch (K*IC, HW) — im2col staging tile
# --------------------------------------------------------------------------
def bn_relu_convw_concat_kernel(x_ref, h_ref, scale_ref, shift_ref,
                                w2f_ref, mask_ref, o_ref, col_ref):
    C = x_ref.shape[1]
    IC = h_ref.shape[1]
    HW = h_ref.shape[2]

    hn = jnp.maximum(h_ref[0] * scale_ref[...] + shift_ref[...], 0.0)     # (IC, HW)

    # Build the im2col operand: row block k holds hn shifted by (k - PAD)
    # along the flattened H*W lane axis (an XLU lane rotation).  Positions
    # where the shift crosses a W-row boundary correspond exactly to the
    # conv's zero-padding region and are zeroed by the precomputed lane mask,
    # so no zero-padded staging buffer (and no re-zeroing) is needed.
    for k in range(KSIZE):                              # static unroll, 25 taps
        d = k - PAD
        shifted = hn if d == 0 else pltpu.roll(hn, shift=(-d) % HW, axis=1)
        col_ref[k * IC:(k + 1) * IC, :] = shifted * mask_ref[k]

    # One deep matmul: contraction depth K*IC (=400) instead of 25 taps of
    # depth IC (=16).
    conv = jnp.dot(w2f_ref[...], col_ref[...],
                   preferred_element_type=jnp.float32)                    # (G, HW)

    # Fused channel concat: write [x ; conv] straight into the final output.
    o_ref[0, :C, :] = x_ref[0]
    o_ref[0, C:, :] = conv.astype(o_ref.dtype)


# --------------------------------------------------------------------------
# Wrapper
# --------------------------------------------------------------------------
@jax.jit
def bottleneck_forward(x, w1, w2, gamma1, beta1, gamma2, beta2):
    """x: (N, C, H, W) float32 NCHW.  Returns (N, C + growth, H, W)."""
    N, C, H, W = x.shape
    IC = w1.shape[0]              # interChannels = 4 * growthRate
    G = w2.shape[0]               # growthRate
    K = w2.shape[3]
    assert K == KSIZE
    HW = H * W

    # ---- BN1 statistics (train-mode batch stats, biased variance) ----------
    mean1 = jnp.mean(x, axis=(0, 2, 3))
    var1 = jnp.mean(jnp.square(x), axis=(0, 2, 3)) - mean1 * mean1
    scale1 = gamma1 * jax.lax.rsqrt(var1 + EPS)
    shift1 = beta1 - mean1 * scale1

    # ---- kernel 1: BN1 + ReLU + 1x1 conv (channel-major, no transpose) -----
    x3 = x.reshape(N, C, HW)          # free, contiguous reshape of NCHW
    w1m = w1[:, :, 0, 0]              # (IC, C)
    TL = _pick_tile(HW)               # lane tile of the H*W axis (<= 2048)
    T = HW // TL

    h3, psum, psq = pl.pallas_call(
        bn_relu_conv1x1_kernel,
        out_shape=(
            jax.ShapeDtypeStruct((N, IC, HW), jnp.float32),
            jax.ShapeDtypeStruct((N, T, IC, 1), jnp.float32),
            jax.ShapeDtypeStruct((N, T, IC, 1), jnp.float32),
        ),
        grid_spec=pltpu.PrefetchScalarGridSpec(
            num_scalar_prefetch=0,
            grid=(N, T),
            in_specs=[
                pl.BlockSpec((1, C, TL), lambda n, t: (n, 0, t)),
                pl.BlockSpec((C, 1), lambda n, t: (0, 0)),
                pl.BlockSpec((C, 1), lambda n, t: (0, 0)),
                pl.BlockSpec((IC, C), lambda n, t: (0, 0)),
            ],
            out_specs=(
                pl.BlockSpec((1, IC, TL), lambda n, t: (n, 0, t)),
                pl.BlockSpec((1, 1, IC, 1), lambda n, t: (n, t, 0, 0)),
                pl.BlockSpec((1, 1, IC, 1), lambda n, t: (n, t, 0, 0)),
            ),
        ),
        compiler_params=pltpu.CompilerParams(
            dimension_semantics=("parallel", "parallel")),
    )(x3, scale1.reshape(C, 1), shift1.reshape(C, 1), w1m)

    # ---- BN2 statistics from the fused partial sums (no extra pass over h) -
    inv_m = 1.0 / float(N * HW)
    mean2 = jnp.sum(psum, axis=(0, 1))[:, 0] * inv_m          # (IC,)
    ex2 = jnp.sum(psq, axis=(0, 1))[:, 0] * inv_m
    var2 = jnp.maximum(ex2 - mean2 * mean2, 0.0)              # biased variance
    scale2 = gamma2 * jax.lax.rsqrt(var2 + EPS)
    shift2 = beta2 - mean2 * scale2

    # conv2 weight flattened so one matmul contracts over K*IC;
    # row ordering matches the im2col rows (k major, then ic).
    w2f = jnp.transpose(w2[:, :, 0, :], (0, 2, 1)).reshape(G, K * IC)

    # Lane mask implementing the (0,12) zero padding after H*W flattening:
    # tap k is valid at flat position p iff 0 <= (p % W) + k - PAD < W.
    wpos = np.arange(HW) % W
    mask_np = np.stack(
        [((wpos + (k - PAD) >= 0) & (wpos + (k - PAD) < W)) for k in range(K)],
        axis=0)
    mask = jnp.asarray(mask_np, dtype=jnp.float32).reshape(K, 1, HW)

    # ---- kernel 2: BN2 + ReLU + (1,25) conv + fused concat with x ----------
    out3 = pl.pallas_call(
        bn_relu_convw_concat_kernel,
        out_shape=jax.ShapeDtypeStruct((N, C + G, HW), jnp.float32),
        grid_spec=pltpu.PrefetchScalarGridSpec(
            num_scalar_prefetch=0,
            grid=(N,),
            in_specs=[
                pl.BlockSpec((1, C, HW), lambda n: (n, 0, 0)),
                pl.BlockSpec((1, IC, HW), lambda n: (n, 0, 0)),
                pl.BlockSpec((IC, 1), lambda n: (0, 0)),
                pl.BlockSpec((IC, 1), lambda n: (0, 0)),
                pl.BlockSpec((G, K * IC), lambda n: (0, 0)),
                pl.BlockSpec((K, 1, HW), lambda n: (0, 0, 0)),
            ],
            out_specs=pl.BlockSpec((1, C + G, HW), lambda n: (n, 0, 0)),
            scratch_shapes=[pltpu.VMEM((K * IC, HW), jnp.float32)],
        ),
        compiler_params=pltpu.CompilerParams(
            dimension_semantics=("parallel",)),
    )(x3, h3, scale2.reshape(IC, 1), shift2.reshape(IC, 1), w2f, mask)

    # TODO(synk): for very large H*W, tile the H*W axis of kernel 2 with a
    # +/-PAD halo instead of processing one full sample per grid step.
    return out3.reshape(N, C + G, H, W)     # free reshape; already NCHW order


# --------------------------------------------------------------------------
# Pure-JAX reference (sanity check for the Pallas path)
# --------------------------------------------------------------------------
def bottleneck_reference(x, w1, w2, gamma1, beta1, gamma2, beta2):
    def bn_relu(v, gamma, beta):
        mean = jnp.mean(v, axis=(0, 2, 3), keepdims=True)
        var = jnp.mean((v - mean) ** 2, axis=(0, 2, 3), keepdims=True)
        vn = (v - mean) / jnp.sqrt(var + EPS)
        vn = vn * gamma.reshape(1, -1, 1, 1) + beta.reshape(1, -1, 1, 1)
        return jnp.maximum(vn, 0.0)

    h = jax.lax.conv_general_dilated(
        bn_relu(x, gamma1, beta1), w1, (1, 1), "VALID",
        dimension_numbers=("NCHW", "OIHW", "NCHW"))
    out = jax.lax.conv_general_dilated(
        bn_relu(h, gamma2, beta2), w2, (1, 1), [(0, 0), (PAD, PAD)],
        dimension_numbers=("NCHW", "OIHW", "NCHW"))
    return jnp.concatenate([x, out], axis=1)


if __name__ == "__main__":
    # Small shapes consistent with the module: nChannels=4, growthRate=4
    N, C, H, W = 2, 4, 8, 16
    growth = 4
    inter = 4 * growth

    key = jax.random.PRNGKey(0)
    k_x, k_w1, k_w2, k_g1, k_b1, k_g2, k_b2 = jax.random.split(key, 7)

    x = jax.random.normal(k_x, (N, C, H, W), jnp.float32)
    w1 = 0.1 * jax.random.normal(k_w1, (inter, C, 1, 1), jnp.float32)          # Conv2d 1x1
    w2 = 0.1 * jax.random.normal(k_w2, (growth, inter, 1, KSIZE), jnp.float32)  # Conv2d (1,25)
    gamma1 = 1.0 + 0.1 * jax.random.normal(k_g1, (C,), jnp.float32)
    beta1 = 0.1 * jax.random.normal(k_b1, (C,), jnp.float32)
    gamma2 = 1.0 + 0.1 * jax.random.normal(k_g2, (inter,), jnp.float32)
    beta2 = 0.1 * jax.random.normal(k_b2, (inter,), jnp.float32)

    out = bottleneck_forward(x, w1, w2, gamma1, beta1, gamma2, beta2)
    out = jax.block_until_ready(out)

    ref = bottleneck_reference(x, w1, w2, gamma1, beta1, gamma2, beta2)
    assert out.shape == (N, C + growth, H, W), out.shape
    max_err = float(jnp.max(jnp.abs(out - ref)))
    assert max_err < 2e-4, max_err

    print("KERNEL_OK")
</pallas_src>

<mosaic_0001>
module attributes {stable_mosaic.version = 11 : i64} {
  func.func @bn_relu_conv1x1_kernel(%arg0: i32, %arg1: i32, %arg2: memref<1x4x128xf32, #tpu.memory_space<vmem>>, %arg3: memref<4x1xf32, #tpu.memory_space<vmem>>, %arg4: memref<4x1xf32, #tpu.memory_space<vmem>>, %arg5: memref<16x4xf32, #tpu.memory_space<vmem>>, %arg6: memref<1x16x128xf32, #tpu.memory_space<vmem>>, %arg7: memref<1x1x16x1xf32, #tpu.memory_space<vmem>>, %arg8: memref<1x1x16x1xf32, #tpu.memory_space<vmem>>) attributes {dimension_semantics = [#tpu.dimension_semantics<parallel>, #tpu.dimension_semantics<parallel>], iteration_bounds = array<i64: 2, 1>, scalar_prefetch = 0 : i64, scratch_operands = 0 : i64, tpu.core_type = #tpu.core_type<tc>, window_params = [{transform_indices = @transform_0, window_bounds = array<i64: 1, 4, 128>}, {pipeline_mode = #tpu.pipeline_mode<synchronous>, transform_indices = @transform_1, window_bounds = array<i64: 4, 1>}, {pipeline_mode = #tpu.pipeline_mode<synchronous>, transform_indices = @transform_2, window_bounds = array<i64: 4, 1>}, {pipeline_mode = #tpu.pipeline_mode<synchronous>, transform_indices = @transform_3, window_bounds = array<i64: 16, 4>}, {transform_indices = @transform_4, window_bounds = array<i64: 1, 16, 128>}, {transform_indices = @transform_5, window_bounds = array<i64: 1, 1, 16, 1>}, {transform_indices = @transform_6, window_bounds = array<i64: 1, 1, 16, 1>}]} {
    %c0 = arith.constant 0 : index
    %c0_0 = arith.constant 0 : index
    %c0_1 = arith.constant 0 : index
    %0 = vector.load %arg2[%c0, %c0_0, %c0_1] : memref<1x4x128xf32, #tpu.memory_space<vmem>>, vector<1x4x128xf32>
    %1 = vector.shape_cast %0 : vector<1x4x128xf32> to vector<4x128xf32>
    %c0_2 = arith.constant 0 : index
    %c0_3 = arith.constant 0 : index
    %2 = vector.load %arg3[%c0_2, %c0_3] : memref<4x1xf32, #tpu.memory_space<vmem>>, vector<4x1xf32>
    %3 = vector.broadcast %2 : vector<4x1xf32> to vector<4x128xf32>
    %4 = arith.mulf %1, %3 : vector<4x128xf32>
    %c0_4 = arith.constant 0 : index
    %c0_5 = arith.constant 0 : index
    %5 = vector.load %arg4[%c0_4, %c0_5] : memref<4x1xf32, #tpu.memory_space<vmem>>, vector<4x1xf32>
    %6 = vector.broadcast %5 : vector<4x1xf32> to vector<4x128xf32>
    %7 = arith.addf %4, %6 : vector<4x128xf32>
    %cst = arith.constant 0.000000e+00 : f32
    %8 = vector.broadcast %cst : f32 to vector<4x128xf32>
    %9 = arith.maximumf %7, %8 : vector<4x128xf32>
    %c0_6 = arith.constant 0 : index
    %c0_7 = arith.constant 0 : index
    %10 = vector.load %arg5[%c0_6, %c0_7] : memref<16x4xf32, #tpu.memory_space<vmem>>, vector<16x4xf32>
    %cst_8 = arith.constant dense<0.000000e+00> : vector<16x128xf32>
    %11 = tpu.matmul %10, %9, %cst_8 {dimension_numbers = #tpu.dot_dimension_numbers<[1], [0], [0], [1], [0, 0, 1, 1], [], []>} : vector<16x4xf32>, vector<4x128xf32>, vector<16x128xf32> -> vector<16x128xf32>
    %c0_9 = arith.constant 0 : index
    %c0_10 = arith.constant 0 : index
    %c0_11 = arith.constant 0 : index
    %12 = vector.load %arg6[%c0_9, %c0_10, %c0_11] : memref<1x16x128xf32, #tpu.memory_space<vmem>>, vector<1x16x128xf32>
    %13 = vector.shape_cast %12 : vector<1x16x128xf32> to vector<16x128xf32>
    %14 = vector.shape_cast %11 : vector<16x128xf32> to vector<1x16x128xf32>
    tpu.vector_store %arg6[%c0_9, %c0_10, %c0_11], %14 {strides = array<i32>} : memref<1x16x128xf32, #tpu.memory_space<vmem>>, vector<1x16x128xf32>,
    %cst_12 = arith.constant dense<0.000000e+00> : vector<16xf32>
    %15 = vector.multi_reduction <add>, %11, %cst_12 [1] : vector<16x128xf32> to vector<16xf32>
    %16 = vector.shape_cast %15 : vector<16xf32> to vector<16x1xf32>
    %c0_13 = arith.constant 0 : index
    %c0_14 = arith.constant 0 : index
    %c0_15 = arith.constant 0 : index
    %c0_16 = arith.constant 0 : index
    %17 = vector.load %arg7[%c0_13, %c0_14, %c0_15, %c0_16] : memref<1x1x16x1xf32, #tpu.memory_space<vmem>>, vector<1x1x16x1xf32>
    %18 = vector.shape_cast %17 : vector<1x1x16x1xf32> to vector<16x1xf32>
    %19 = vector.shape_cast %16 : vector<16x1xf32> to vector<1x1x16x1xf32>
    tpu.vector_store %arg7[%c0_13, %c0_14, %c0_15, %c0_16], %19 {strides = array<i32>} : memref<1x1x16x1xf32, #tpu.memory_space<vmem>>, vector<1x1x16x1xf32>,
    %20 = arith.mulf %11, %11 : vector<16x128xf32>
    %cst_17 = arith.constant dense<0.000000e+00> : vector<16xf32>
    %21 = vector.multi_reduction <add>, %20, %cst_17 [1] : vector<16x128xf32> to vector<16xf32>
    %22 = vector.shape_cast %21 : vector<16xf32> to vector<16x1xf32>
    %c0_18 = arith.constant 0 : index
    %c0_19 = arith.constant 0 : index
    %c0_20 = arith.constant 0 : index
    %c0_21 = arith.constant 0 : index
    %23 = vector.load %arg8[%c0_18, %c0_19, %c0_20, %c0_21] : memref<1x1x16x1xf32, #tpu.memory_space<vmem>>, vector<1x1x16x1xf32>
    %24 = vector.shape_cast %23 : vector<1x1x16x1xf32> to vector<16x1xf32>
    %25 = vector.shape_cast %22 : vector<16x1xf32> to vector<1x1x16x1xf32>
    tpu.vector_store %arg8[%c0_18, %c0_19, %c0_20, %c0_21], %25 {strides = array<i32>} : memref<1x1x16x1xf32, #tpu.memory_space<vmem>>, vector<1x1x16x1xf32>,
    return
  }
  func.func @transform_0(%arg0: i32, %arg1: i32) -> (i32, i32, i32) {
    %c0_i32 = arith.constant 0 : i32
    %c0_i32_0 = arith.constant 0 : i32
    return %arg0, %c0_i32, %arg1 : i32, i32, i32
  }
  func.func @transform_1(%arg0: i32, %arg1: i32) -> (i32, i32) {
    %c0_i32 = arith.constant 0 : i32
    %c0_i32_0 = arith.constant 0 : i32
    %c0_i32_1 = arith.constant 0 : i32
    return %c0_i32, %c0_i32_0 : i32, i32
  }
  func.func @transform_2(%arg0: i32, %arg1: i32) -> (i32, i32) {
    %c0_i32 = arith.constant 0 : i32
    %c0_i32_0 = arith.constant 0 : i32
    %c0_i32_1 = arith.constant 0 : i32
    return %c0_i32, %c0_i32_0 : i32, i32
  }
  func.func @transform_3(%arg0: i32, %arg1: i32) -> (i32, i32) {
    %c0_i32 = arith.constant 0 : i32
    %c0_i32_0 = arith.constant 0 : i32
    %c0_i32_1 = arith.constant 0 : i32
    return %c0_i32, %c0_i32_0 : i32, i32
  }
  func.func @transform_4(%arg0: i32, %arg1: i32) -> (i32, i32, i32) {
    %c0_i32 = arith.constant 0 : i32
    %c0_i32_0 = arith.constant 0 : i32
    return %arg0, %c0_i32, %arg1 : i32, i32, i32
  }
  func.func @transform_5(%arg0: i32, %arg1: i32) -> (i32, i32, i32, i32) {
    %c0_i32 = arith.constant 0 : i32
    %c0_i32_0 = arith.constant 0 : i32
    %c0_i32_1 = arith.constant 0 : i32
    return %arg0, %arg1, %c0_i32, %c0_i32_0 : i32, i32, i32, i32
  }
  func.func @transform_6(%arg0: i32, %arg1: i32) -> (i32, i32, i32, i32) {
    %c0_i32 = arith.constant 0 : i32
    %c0_i32_0 = arith.constant 0 : i32
    %c0_i32_1 = arith.constant 0 : i32
    return %arg0, %arg1, %c0_i32, %c0_i32_0 : i32, i32, i32, i32
  }
}

module attributes {stable_mosaic.version = 11 : i64} {
  func.func @bn_relu_convw_concat_kernel(%arg0: i32, %arg1: memref<1x4x128xf32, #tpu.memory_space<vmem>>, %arg2: memref<1x16x128xf32, #tpu.memory_space<vmem>>, %arg3: memref<16x1xf32, #tpu.memory_space<vmem>>, %arg4: memref<16x1xf32, #tpu.memory_space<vmem>>, %arg5: memref<4x400xf32, #tpu.memory_space<vmem>>, %arg6: memref<25x1x128xf32, #tpu.memory_space<vmem>>, %arg7: memref<1x8x128xf32, #tpu.memory_space<vmem>>, %arg8: memref<400x128xf32, #tpu.memory_space<vmem>>) attributes {dimension_semantics = [#tpu.dimension_semantics<parallel>], iteration_bounds = array<i64: 2>, scalar_prefetch = 0 : i64, scratch_operands = 1 : i64, tpu.core_type = #tpu.core_type<tc>, window_params = [{transform_indices = @transform_0, window_bounds = array<i64: 1, 4, 128>}, {transform_indices = @transform_1, window_bounds = array<i64: 1, 16, 128>}, {pipeline_mode = #tpu.pipeline_mode<synchronous>, transform_indices = @transform_2, window_bounds = array<i64: 16, 1>}, {pipeline_mode = #tpu.pipeline_mode<synchronous>, transform_indices = @transform_3, window_bounds = array<i64: 16, 1>}, {pipeline_mode = #tpu.pipeline_mode<synchronous>, transform_indices = @transform_4, window_bounds = array<i64: 4, 400>}, {pipeline_mode = #tpu.pipeline_mode<synchronous>, transform_indices = @transform_5, window_bounds = array<i64: 25, 1, 128>}, {transform_indices = @transform_6, window_bounds = array<i64: 1, 8, 128>}]} {
    %c0 = arith.constant 0 : index
    %c0_0 = arith.constant 0 : index
    %c0_1 = arith.constant 0 : index
    %0 = vector.load %arg2[%c0, %c0_0, %c0_1] : memref<1x16x128xf32, #tpu.memory_space<vmem>>, vector<1x16x128xf32>
    %1 = vector.shape_cast %0 : vector<1x16x128xf32> to vector<16x128xf32>
    %c0_2 = arith.constant 0 : index
    %c0_3 = arith.constant 0 : index
    %2 = vector.load %arg3[%c0_2, %c0_3] : memref<16x1xf32, #tpu.memory_space<vmem>>, vector<16x1xf32>
    %3 = vector.broadcast %2 : vector<16x1xf32> to vector<16x128xf32>
    %4 = arith.mulf %1, %3 : vector<16x128xf32>
    %c0_4 = arith.constant 0 : index
    %c0_5 = arith.constant 0 : index
    %5 = vector.load %arg4[%c0_4, %c0_5] : memref<16x1xf32, #tpu.memory_space<vmem>>, vector<16x1xf32>
    %6 = vector.broadcast %5 : vector<16x1xf32> to vector<16x128xf32>
    %7 = arith.addf %4, %6 : vector<16x128xf32>
    %cst = arith.constant 0.000000e+00 : f32
    %8 = vector.broadcast %cst : f32 to vector<16x128xf32>
    %9 = arith.maximumf %7, %8 : vector<16x128xf32>
    %c12_i32 = arith.constant 12 : i32
    %10 = tpu.dynamic_rotate %9 by %c12_i32 dim 1 : vector<16x128xf32>, i32 -> vector<16x128xf32>
    %c0_6 = arith.constant 0 : index
    %c0_7 = arith.constant 0 : index
    %c0_8 = arith.constant 0 : index
    %11 = vector.load %arg6[%c0_6, %c0_7, %c0_8] : memref<25x1x128xf32, #tpu.memory_space<vmem>>, vector<1x1x128xf32>
    %12 = vector.shape_cast %11 : vector<1x1x128xf32> to vector<1x128xf32>
    %13 = vector.broadcast %12 : vector<1x128xf32> to vector<16x128xf32>
    %14 = arith.mulf %10, %13 : vector<16x128xf32>
    %c0_9 = arith.constant 0 : index
    %c0_10 = arith.constant 0 : index
    %15 = vector.load %arg8[%c0_9, %c0_10] : memref<400x128xf32, #tpu.memory_space<vmem>>, vector<16x128xf32>
    tpu.vector_store %arg8[%c0_9, %c0_10], %14 {strides = array<i32>} : memref<400x128xf32, #tpu.memory_space<vmem>>, vector<16x128xf32>,
    %c11_i32 = arith.constant 11 : i32
    %16 = tpu.dynamic_rotate %9 by %c11_i32 dim 1 : vector<16x128xf32>, i32 -> vector<16x128xf32>
    %c1 = arith.constant 1 : index
    %c0_11 = arith.constant 0 : index
    %c0_12 = arith.constant 0 : index
    %17 = vector.load %arg6[%c1, %c0_11, %c0_12] : memref<25x1x128xf32, #tpu.memory_space<vmem>>, vector<1x1x128xf32>
    %18 = vector.shape_cast %17 : vector<1x1x128xf32> to vector<1x128xf32>
    %19 = vector.broadcast %18 : vector<1x128xf32> to vector<16x128xf32>
    %20 = arith.mulf %16, %19 : vector<16x128xf32>
    %c16 = arith.constant 16 : index
    %c0_13 = arith.constant 0 : index
    %21 = vector.load %arg8[%c16, %c0_13] : memref<400x128xf32, #tpu.memory_space<vmem>>, vector<16x128xf32>
    tpu.vector_store %arg8[%c16, %c0_13], %20 {strides = array<i32>} : memref<400x128xf32, #tpu.memory_space<vmem>>, vector<16x128xf32>,
    %c10_i32 = arith.constant 10 : i32
    %22 = tpu.dynamic_rotate %9 by %c10_i32 dim 1 : vector<16x128xf32>, i32 -> vector<16x128xf32>
    %c2 = arith.constant 2 : index
    %c0_14 = arith.constant 0 : index
    %c0_15 = arith.constant 0 : index
    %23 = vector.load %arg6[%c2, %c0_14, %c0_15] : memref<25x1x128xf32, #tpu.memory_space<vmem>>, vector<1x1x128xf32>
    %24 = vector.shape_cast %23 : vector<1x1x128xf32> to vector<1x128xf32>
    %25 = vector.broadcast %24 : vector<1x128xf32> to vector<16x128xf32>
    %26 = arith.mulf %22, %25 : vector<16x128xf32>
    %c32 = arith.constant 32 : index
    %c0_16 = arith.constant 0 : index
    %27 = vector.load %arg8[%c32, %c0_16] : memref<400x128xf32, #tpu.memory_space<vmem>>, vector<16x128xf32>
    tpu.vector_store %arg8[%c32, %c0_16], %26 {strides = array<i32>} : memref<400x128xf32, #tpu.memory_space<vmem>>, vector<16x128xf32>,
    %c9_i32 = arith.constant 9 : i32
    %28 = tpu.dynamic_rotate %9 by %c9_i32 dim 1 : vector<16x128xf32>, i32 -> vector<16x128xf32>
    %c3 = arith.constant 3 : index
    %c0_17 = arith.constant 0 : index
    %c0_18 = arith.constant 0 : index
    %29 = vector.load %arg6[%c3, %c0_17, %c0_18] : memref<25x1x128xf32, #tpu.memory_space<vmem>>, vector<1x1x128xf32>
    %30 = vector.shape_cast %29 : vector<1x1x128xf32> to vector<1x128xf32>
    %31 = vector.broadcast %30 : vector<1x128xf32> to vector<16x128xf32>
    %32 = arith.mulf %28, %31 : vector<16x128xf32>
    %c48 = arith.constant 48 : index
    %c0_19 = arith.constant 0 : index
    %33 = vector.load %arg8[%c48, %c0_19] : memref<400x128xf32, #tpu.memory_space<vmem>>, vector<16x128xf32>
    tpu.vector_store %arg8[%c48, %c0_19], %32 {strides = array<i32>} : memref<400x128xf32, #tpu.memory_space<vmem>>, vector<16x128xf32>,
    %c8_i32 = arith.constant 8 : i32
    %34 = tpu.dynamic_rotate %9 by %c8_i32 dim 1 : vector<16x128xf32>, i32 -> vector<16x128xf32>
    %c4 = arith.constant 4 : index
    %c0_20 = arith.constant 0 : index
    %c0_21 = arith.constant 0 : index
    %35 = vector.load %arg6[%c4, %c0_20, %c0_21] : memref<25x1x128xf32, #tpu.memory_space<vmem>>, vector<1x1x128xf32>
    %36 = vector.shape_cast %35 : vector<1x1x128xf32> to vector<1x128xf32>
    %37 = vector.broadcast %36 : vector<1x128xf32> to vector<16x128xf32>
    %38 = arith.mulf %34, %37 : vector<16x128xf32>
    %c64 = arith.constant 64 : index
    %c0_22 = arith.constant 0 : index
    %39 = vector.load %arg8[%c64, %c0_22] : memref<400x128xf32, #tpu.memory_space<vmem>>, vector<16x128xf32>
    tpu.vector_store %arg8[%c64, %c0_22], %38 {strides = array<i32>} : memref<400x128xf32, #tpu.memory_space<vmem>>, vector<16x128xf32>,
    %c7_i32 = arith.constant 7 : i32
    %40 = tpu.dynamic_rotate %9 by %c7_i32 dim 1 : vector<16x128xf32>, i32 -> vector<16x128xf32>
    %c5 = arith.constant 5 : index
    %c0_23 = arith.constant 0 : index
    %c0_24 = arith.constant 0 : index
    %41 = vector.load %arg6[%c5, %c0_23, %c0_24] : memref<25x1x128xf32, #tpu.memory_space<vmem>>, vector<1x1x128xf32>
    %42 = vector.shape_cast %41 : vector<1x1x128xf32> to vector<1x128xf32>
    %43 = vector.broadcast %42 : vector<1x128xf32> to vector<16x128xf32>
    %44 = arith.mulf %40, %43 : vector<16x128xf32>
    %c80 = arith.constant 80 : index
    %c0_25 = arith.constant 0 : index
    %45 = vector.load %arg8[%c80, %c0_25] : memref<400x128xf32, #tpu.memory_space<vmem>>, vector<16x128xf32>
    tpu.vector_store %arg8[%c80, %c0_25], %44 {strides = array<i32>} : memref<400x128xf32, #tpu.memory_space<vmem>>, vector<16x128xf32>,
    %c6_i32 = arith.constant 6 : i32
    %46 = tpu.dynamic_rotate %9 by %c6_i32 dim 1 : vector<16x128xf32>, i32 -> vector<16x128xf32>
    %c6 = arith.constant 6 : index
    %c0_26 = arith.constant 0 : index
    %c0_27 = arith.constant 0 : index
    %47 = vector.load %arg6[%c6, %c0_26, %c0_27] : memref<25x1x128xf32, #tpu.memory_space<vmem>>, vector<1x1x128xf32>
    %48 = vector.shape_cast %47 : vector<1x1x128xf32> to vector<1x128xf32>
    %49 = vector.broadcast %48 : vector<1x128xf32> to vector<16x128xf32>
    %50 = arith.mulf %46, %49 : vector<16x128xf32>
    %c96 = arith.constant 96 : index
    %c0_28 = arith.constant 0 : index
    %51 = vector.load %arg8[%c96, %c0_28] : memref<400x128xf32, #tpu.memory_space<vmem>>, vector<16x128xf32>
    tpu.vector_store %arg8[%c96, %c0_28], %50 {strides = array<i32>} : memref<400x128xf32, #tpu.memory_space<vmem>>, vector<16x128xf32>,
    %c5_i32 = arith.constant 5 : i32
    %52 = tpu.dynamic_rotate %9 by %c5_i32 dim 1 : vector<16x128xf32>, i32 -> vector<16x128xf32>
    %c7 = arith.constant 7 : index
    %c0_29 = arith.constant 0 : index
    %c0_30 = arith.constant 0 : index
    %53 = vector.load %arg6[%c7, %c0_29, %c0_30] : memref<25x1x128xf32, #tpu.memory_space<vmem>>, vector<1x1x128xf32>
    %54 = vector.shape_cast %53 : vector<1x1x128xf32> to vector<1x128xf32>
    %55 = vector.broadcast %54 : vector<1x128xf32> to vector<16x128xf32>
    %56 = arith.mulf %52, %55 : vector<16x128xf32>
    %c112 = arith.constant 112 : index
    %c0_31 = arith.constant 0 : index
    %57 = vector.load %arg8[%c112, %c0_31] : memref<400x128xf32, #tpu.memory_space<vmem>>, vector<16x128xf32>
    tpu.vector_store %arg8[%c112, %c0_31], %56 {strides = array<i32>} : memref<400x128xf32, #tpu.memory_space<vmem>>, vector<16x128xf32>,
    %c4_i32 = arith.constant 4 : i32
    %58 = tpu.dynamic_rotate %9 by %c4_i32 dim 1 : vector<16x128xf32>, i32 -> vector<16x128xf32>
    %c8 = arith.constant 8 : index
    %c0_32 = arith.constant 0 : index
    %c0_33 = arith.constant 0 : index
    %59 = vector.load %arg6[%c8, %c0_32, %c0_33] : memref<25x1x128xf32, #tpu.memory_space<vmem>>, vector<1x1x128xf32>
    %60 = vector.shape_cast %59 : vector<1x1x128xf32> to vector<1x128xf32>
    %61 = vector.broadcast %60 : vector<1x128xf32> to vector<16x128xf32>
    %62 = arith.mulf %58, %61 : vector<16x128xf32>
    %c128 = arith.constant 128 : index
    %c0_34 = arith.constant 0 : index
    %63 = vector.load %arg8[%c128, %c0_34] : memref<400x128xf32, #tpu.memory_space<vmem>>, vector<16x128xf32>
    tpu.vector_store %arg8[%c128, %c0_34], %62 {strides = array<i32>} : memref<400x128xf32, #tpu.memory_space<vmem>>, vector<16x128xf32>,
    %c3_i32 = arith.constant 3 : i32
    %64 = tpu.dynamic_rotate %9 by %c3_i32 dim 1 : vector<16x128xf32>, i32 -> vector<16x128xf32>
    %c9 = arith.constant 9 : index
    %c0_35 = arith.constant 0 : index
    %c0_36 = arith.constant 0 : index
    %65 = vector.load %arg6[%c9, %c0_35, %c0_36] : memref<25x1x128xf32, #tpu.memory_space<vmem>>, vector<1x1x128xf32>
    %66 = vector.shape_cast %65 : vector<1x1x128xf32> to vector<1x128xf32>
    %67 = vector.broadcast %66 : vector<1x128xf32> to vector<16x128xf32>
    %68 = arith.mulf %64, %67 : vector<16x128xf32>
    %c144 = arith.constant 144 : index
    %c0_37 = arith.constant 0 : index
    %69 = vector.load %arg8[%c144, %c0_37] : memref<400x128xf32, #tpu.memory_space<vmem>>, vector<16x128xf32>
    tpu.vector_store %arg8[%c144, %c0_37], %68 {strides = array<i32>} : memref<400x128xf32, #tpu.memory_space<vmem>>, vector<16x128xf32>,
    %c2_i32 = arith.constant 2 : i32
    %70 = tpu.dynamic_rotate %9 by %c2_i32 dim 1 : vector<16x128xf32>, i32 -> vector<16x128xf32>
    %c10 = arith.constant 10 : index
    %c0_38 = arith.constant 0 : index
    %c0_39 = arith.constant 0 : index
    %71 = vector.load %arg6[%c10, %c0_38, %c0_39] : memref<25x1x128xf32, #tpu.memory_space<vmem>>, vector<1x1x128xf32>
    %72 = vector.shape_cast %71 : vector<1x1x128xf32> to vector<1x128xf32>
    %73 = vector.broadcast %72 : vector<1x128xf32> to vector<16x128xf32>
    %74 = arith.mulf %70, %73 : vector<16x128xf32>
    %c160 = arith.constant 160 : index
    %c0_40 = arith.constant 0 : index
    %75 = vector.load %arg8[%c160, %c0_40] : memref<400x128xf32, #tpu.memory_space<vmem>>, vector<16x128xf32>
    tpu.vector_store %arg8[%c160, %c0_40], %74 {strides = array<i32>} : memref<400x128xf32, #tpu.memory_space<vmem>>, vector<16x128xf32>,
    %c1_i32 = arith.constant 1 : i32
    %76 = tpu.dynamic_rotate %9 by %c1_i32 dim 1 : vector<16x128xf32>, i32 -> vector<16x128xf32>
    %c11 = arith.constant 11 : index
    %c0_41 = arith.constant 0 : index
    %c0_42 = arith.constant 0 : index
    %77 = vector.load %arg6[%c11, %c0_41, %c0_42] : memref<25x1x128xf32, #tpu.memory_space<vmem>>, vector<1x1x128xf32>
    %78 = vector.shape_cast %77 : vector<1x1x128xf32> to vector<1x128xf32>
    %79 = vector.broadcast %78 : vector<1x128xf32> to vector<16x128xf32>
    %80 = arith.mulf %76, %79 : vector<16x128xf32>
    %c176 = arith.constant 176 : index
    %c0_43 = arith.constant 0 : index
    %81 = vector.load %arg8[%c176, %c0_43] : memref<400x128xf32, #tpu.memory_space<vmem>>, vector<16x128xf32>
    tpu.vector_store %arg8[%c176, %c0_43], %80 {strides = array<i32>} : memref<400x128xf32, #tpu.memory_space<vmem>>, vector<16x128xf32>,
    %c12 = arith.constant 12 : index
    %c0_44 = arith.constant 0 : index
    %c0_45 = arith.constant 0 : index
    %82 = vector.load %arg6[%c12, %c0_44, %c0_45] : memref<25x1x128xf32, #tpu.memory_space<vmem>>, vector<1x1x128xf32>
    %83 = vector.shape_cast %82 : vector<1x1x128xf32> to vector<1x128xf32>
    %84 = vector.broadcast %83 : vector<1x128xf32> to vector<16x128xf32>
    %85 = arith.mulf %9, %84 : vector<16x128xf32>
    %c192 = arith.constant 192 : index
    %c0_46 = arith.constant 0 : index
    %86 = vector.load %arg8[%c192, %c0_46] : memref<400x128xf32, #tpu.memory_space<vmem>>, vector<16x128xf32>
    tpu.vector_store %arg8[%c192, %c0_46], %85 {strides = array<i32>} : memref<400x128xf32, #tpu.memory_space<vmem>>, vector<16x128xf32>,
    %c127_i32 = arith.constant 127 : i32
    %87 = tpu.dynamic_rotate %9 by %c127_i32 dim 1 : vector<16x128xf32>, i32 -> vector<16x128xf32>
    %c13 = arith.constant 13 : index
    %c0_47 = arith.constant 0 : index
    %c0_48 = arith.constant 0 : index
    %88 = vector.load %arg6[%c13, %c0_47, %c0_48] : memref<25x1x128xf32, #tpu.memory_space<vmem>>, vector<1x1x128xf32>
    %89 = vector.shape_cast %88 : vector<1x1x128xf32> to vector<1x128xf32>
    %90 = vector.broadcast %89 : vector<1x128xf32> to vector<16x128xf32>
    %91 = arith.mulf %87, %90 : vector<16x128xf32>
    %c208 = arith.constant 208 : index
    %c0_49 = arith.constant 0 : index
    %92 = vector.load %arg8[%c208, %c0_49] : memref<400x128xf32, #tpu.memory_space<vmem>>, vector<16x128xf32>
    tpu.vector_store %arg8[%c208, %c0_49], %91 {strides = array<i32>} : memref<400x128xf32, #tpu.memory_space<vmem>>, vector<16x128xf32>,
    %c126_i32 = arith.constant 126 : i32
    %93 = tpu.dynamic_rotate %9 by %c126_i32 dim 1 : vector<16x128xf32>, i32 -> vector<16x128xf32>
    %c14 = arith.constant 14 : index
    %c0_50 = arith.constant 0 : index
    %c0_51 = arith.constant 0 : index
    %94 = vector.load %arg6[%c14, %c0_50, %c0_51] : memref<25x1x128xf32, #tpu.memory_space<vmem>>, vector<1x1x128xf32>
    %95 = vector.shape_cast %94 : vector<1x1x128xf32> to vector<1x128xf32>
    %96 = vector.broadcast %95 : vector<1x128xf32> to vector<16x128xf32>
    %97 = arith.mulf %93, %96 : vector<16x128xf32>
    %c224 = arith.constant 224 : index
    %c0_52 = arith.constant 0 : index
    %98 = vector.load %arg8[%c224, %c0_52] : memref<400x128xf32, #tpu.memory_space<vmem>>, vector<16x128xf32>
    tpu.vector_store %arg8[%c224, %c0_52], %97 {strides = array<i32>} : memref<400x128xf32, #tpu.memory_space<vmem>>, vector<16x128xf32>,
    %c125_i32 = arith.constant 125 : i32
    %99 = tpu.dynamic_rotate %9 by %c125_i32 dim 1 : vector<16x128xf32>, i32 -> vector<16x128xf32>
    %c15 = arith.constant 15 : index
    %c0_53 = arith.constant 0 : index
    %c0_54 = arith.constant 0 : index
    %100 = vector.load %arg6[%c15, %c0_53, %c0_54] : memref<25x1x128xf32, #tpu.memory_space<vmem>>, vector<1x1x128xf32>
    %101 = vector.shape_cast %100 : vector<1x1x128xf32> to vector<1x128xf32>
    %102 = vector.broadcast %101 : vector<1x128xf32> to vector<16x128xf32>
    %103 = arith.mulf %99, %102 : vector<16x128xf32>
    %c240 = arith.constant 240 : index
    %c0_55 = arith.constant 0 : index
    %104 = vector.load %arg8[%c240, %c0_55] : memref<400x128xf32, #tpu.memory_space<vmem>>, vector<16x128xf32>
    tpu.vector_store %arg8[%c240, %c0_55], %103 {strides = array<i32>} : memref<400x128xf32, #tpu.memory_space<vmem>>, vector<16x128xf32>,
    %c124_i32 = arith.constant 124 : i32
    %105 = tpu.dynamic_rotate %9 by %c124_i32 dim 1 : vector<16x128xf32>, i32 -> vector<16x128xf32>
    %c16_56 = arith.constant 16 : index
    %c0_57 = arith.constant 0 : index
    %c0_58 = arith.constant 0 : index
    %106 = vector.load %arg6[%c16_56, %c0_57, %c0_58] : memref<25x1x128xf32, #tpu.memory_space<vmem>>, vector<1x1x128xf32>
    %107 = vector.shape_cast %106 : vector<1x1x128xf32> to vector<1x128xf32>
    %108 = vector.broadcast %107 : vector<1x128xf32> to vector<16x128xf32>
    %109 = arith.mulf %105, %108 : vector<16x128xf32>
    %c256 = arith.constant 256 : index
    %c0_59 = arith.constant 0 : index
    %110 = vector.load %arg8[%c256, %c0_59] : memref<400x128xf32, #tpu.memory_space<vmem>>, vector<16x128xf32>
    tpu.vector_store %arg8[%c256, %c0_59], %109 {strides = array<i32>} : memref<400x128xf32, #tpu.memory_space<vmem>>, vector<16x128xf32>,
    %c123_i32 = arith.constant 123 : i32
    %111 = tpu.dynamic_rotate %9 by %c123_i32 dim 1 : vector<16x128xf32>, i32 -> vector<16x128xf32>
    %c17 = arith.constant 17 : index
    %c0_60 = arith.constant 0 : index
    %c0_61 = arith.constant 0 : index
    %112 = vector.load %arg6[%c17, %c0_60, %c0_61] : memref<25x1x128xf32, #tpu.memory_space<vmem>>, vector<1x1x128xf32>
    %113 = vector.shape_cast %112 : vector<1x1x128xf32> to vector<1x128xf32>
    %114 = vector.broadcast %113 : vector<1x128xf32> to vector<16x128xf32>
    %115 = arith.mulf %111, %114 : vector<16x128xf32>
    %c272 = arith.constant 272 : index
    %c0_62 = arith.constant 0 : index
    %116 = vector.load %arg8[%c272, %c0_62] : memref<400x128xf32, #tpu.memory_space<vmem>>, vector<16x128xf32>
    tpu.vector_store %arg8[%c272, %c0_62], %115 {strides = array<i32>} : memref<400x128xf32, #tpu.memory_space<vmem>>, vector<16x128xf32>,
    %c122_i32 = arith.constant 122 : i32
    %117 = tpu.dynamic_rotate %9 by %c122_i32 dim 1 : vector<16x128xf32>, i32 -> vector<16x128xf32>
    %c18 = arith.constant 18 : index
    %c0_63 = arith.constant 0 : index
    %c0_64 = arith.constant 0 : index
    %118 = vector.load %arg6[%c18, %c0_63, %c0_64] : memref<25x1x128xf32, #tpu.memory_space<vmem>>, vector<1x1x128xf32>
    %119 = vector.shape_cast %118 : vector<1x1x128xf32> to vector<1x128xf32>
    %120 = vector.broadcast %119 : vector<1x128xf32> to vector<16x128xf32>
    %121 = arith.mulf %117, %120 : vector<16x128xf32>
    %c288 = arith.constant 288 : index
    %c0_65 = arith.constant 0 : index
    %122 = vector.load %arg8[%c288, %c0_65] : memref<400x128xf32, #tpu.memory_space<vmem>>, vector<16x128xf32>
    tpu.vector_store %arg8[%c288, %c0_65], %121 {strides = array<i32>} : memref<400x128xf32, #tpu.memory_space<vmem>>, vector<16x128xf32>,
    %c121_i32 = arith.constant 121 : i32
    %123 = tpu.dynamic_rotate %9 by %c121_i32 dim 1 : vector<16x128xf32>, i32 -> vector<16x128xf32>
    %c19 = arith.constant 19 : index
    %c0_66 = arith.constant 0 : index
    %c0_67 = arith.constant 0 : index
    %124 = vector.load %arg6[%c19, %c0_66, %c0_67] : memref<25x1x128xf32, #tpu.memory_space<vmem>>, vector<1x1x128xf32>
    %125 = vector.shape_cast %124 : vector<1x1x128xf32> to vector<1x128xf32>
    %126 = vector.broadcast %125 : vector<1x128xf32> to vector<16x128xf32>
    %127 = arith.mulf %123, %126 : vector<16x128xf32>
    %c304 = arith.constant 304 : index
    %c0_68 = arith.constant 0 : index
    %128 = vector.load %arg8[%c304, %c0_68] : memref<400x128xf32, #tpu.memory_space<vmem>>, vector<16x128xf32>
    tpu.vector_store %arg8[%c304, %c0_68], %127 {strides = array<i32>} : memref<400x128xf32, #tpu.memory_space<vmem>>, vector<16x128xf32>,
    %c120_i32 = arith.constant 120 : i32
    %129 = tpu.dynamic_rotate %9 by %c120_i32 dim 1 : vector<16x128xf32>, i32 -> vector<16x128xf32>
    %c20 = arith.constant 20 : index
    %c0_69 = arith.constant 0 : index
    %c0_70 = arith.constant 0 : index
    %130 = vector.load %arg6[%c20, %c0_69, %c0_70] : memref<25x1x128xf32, #tpu.memory_space<vmem>>, vector<1x1x128xf32>
    %131 = vector.shape_cast %130 : vector<1x1x128xf32> to vector<1x128xf32>
    %132 = vector.broadcast %131 : vector<1x128xf32> to vector<16x128xf32>
    %133 = arith.mulf %129, %132 : vector<16x128xf32>
    %c320 = arith.constant 320 : index
    %c0_71 = arith.constant 0 : index
    %134 = vector.load %arg8[%c320, %c0_71] : memref<400x128xf32, #tpu.memory_space<vmem>>, vector<16x128xf32>
    tpu.vector_store %arg8[%c320, %c0_71], %133 {strides = array<i32>} : memref<400x128xf32, #tpu.memory_space<vmem>>, vector<16x128xf32>,
    %c119_i32 = arith.constant 119 : i32
    %135 = tpu.dynamic_rotate %9 by %c119_i32 dim 1 : vector<16x128xf32>, i32 -> vector<16x128xf32>
    %c21 = arith.constant 21 : index
    %c0_72 = arith.constant 0 : index
    %c0_73 = arith.constant 0 : index
    %136 = vector.load %arg6[%c21, %c0_72, %c0_73] : memref<25x1x128xf32, #tpu.memory_space<vmem>>, vector<1x1x128xf32>
    %137 = vector.shape_cast %136 : vector<1x1x128xf32> to vector<1x128xf32>
    %138 = vector.broadcast %137 : vector<1x128xf32> to vector<16x128xf32>
    %139 = arith.mulf %135, %138 : vector<16x128xf32>
    %c336 = arith.constant 336 : index
    %c0_74 = arith.constant 0 : index
    %140 = vector.load %arg8[%c336, %c0_74] : memref<400x128xf32, #tpu.memory_space<vmem>>, vector<16x128xf32>
    tpu.vector_store %arg8[%c336, %c0_74], %139 {strides = array<i32>} : memref<400x128xf32, #tpu.memory_space<vmem>>, vector<16x128xf32>,
    %c118_i32 = arith.constant 118 : i32
    %141 = tpu.dynamic_rotate %9 by %c118_i32 dim 1 : vector<16x128xf32>, i32 -> vector<16x128xf32>
    %c22 = arith.constant 22 : index
    %c0_75 = arith.constant 0 : index
    %c0_76 = arith.constant 0 : index
    %142 = vector.load %arg6[%c22, %c0_75, %c0_76] : memref<25x1x128xf32, #tpu.memory_space<vmem>>, vector<1x1x128xf32>
    %143 = vector.shape_cast %142 : vector<1x1x128xf32> to vector<1x128xf32>
    %144 = vector.broadcast %143 : vector<1x128xf32> to vector<16x128xf32>
    %145 = arith.mulf %141, %144 : vector<16x128xf32>
    %c352 = arith.constant 352 : index
    %c0_77 = arith.constant 0 : index
    %146 = vector.load %arg8[%c352, %c0_77] : memref<400x128xf32, #tpu.memory_space<vmem>>, vector<16x128xf32>
    tpu.vector_store %arg8[%c352, %c0_77], %145 {strides = array<i32>} : memref<400x128xf32, #tpu.memory_space<vmem>>, vector<16x128xf32>,
    %c117_i32 = arith.constant 117 : i32
    %147 = tpu.dynamic_rotate %9 by %c117_i32 dim 1 : vector<16x128xf32>, i32 -> vector<16x128xf32>
    %c23 = arith.constant 23 : index
    %c0_78 = arith.constant 0 : index
    %c0_79 = arith.constant 0 : index
    %148 = vector.load %arg6[%c23, %c0_78, %c0_79] : memref<25x1x128xf32, #tpu.memory_space<vmem>>, vector<1x1x128xf32>
    %149 = vector.shape_cast %148 : vector<1x1x128xf32> to vector<1x128xf32>
    %150 = vector.broadcast %149 : vector<1x128xf32> to vector<16x128xf32>
    %151 = arith.mulf %147, %150 : vector<16x128xf32>
    %c368 = arith.constant 368 : index
    %c0_80 = arith.constant 0 : index
    %152 = vector.load %arg8[%c368, %c0_80] : memref<400x128xf32, #tpu.memory_space<vmem>>, vector<16x128xf32>
    tpu.vector_store %arg8[%c368, %c0_80], %151 {strides = array<i32>} : memref<400x128xf32, #tpu.memory_space<vmem>>, vector<16x128xf32>,
    %c116_i32 = arith.constant 116 : i32
    %153 = tpu.dynamic_rotate %9 by %c116_i32 dim 1 : vector<16x128xf32>, i32 -> vector<16x128xf32>
    %c24 = arith.constant 24 : index
    %c0_81 = arith.constant 0 : index
    %c0_82 = arith.constant 0 : index
    %154 = vector.load %arg6[%c24, %c0_81, %c0_82] : memref<25x1x128xf32, #tpu.memory_space<vmem>>, vector<1x1x128xf32>
    %155 = vector.shape_cast %154 : vector<1x1x128xf32> to vector<1x128xf32>
    %156 = vector.broadcast %155 : vector<1x128xf32> to vector<16x128xf32>
    %157 = arith.mulf %153, %156 : vector<16x128xf32>
    %c384 = arith.constant 384 : index
    %c0_83 = arith.constant 0 : index
    %158 = vector.load %arg8[%c384, %c0_83] : memref<400x128xf32, #tpu.memory_space<vmem>>, vector<16x128xf32>
    tpu.vector_store %arg8[%c384, %c0_83], %157 {strides = array<i32>} : memref<400x128xf32, #tpu.memory_space<vmem>>, vector<16x128xf32>,
    %c0_84 = arith.constant 0 : index
    %c0_85 = arith.constant 0 : index
    %159 = vector.load %arg5[%c0_84, %c0_85] : memref<4x400xf32, #tpu.memory_space<vmem>>, vector<4x400xf32>
    %c0_86 = arith.constant 0 : index
    %c0_87 = arith.constant 0 : index
    %160 = vector.load %arg8[%c0_86, %c0_87] : memref<400x128xf32, #tpu.memory_space<vmem>>, vector<400x128xf32>
    %cst_88 = arith.constant dense<0.000000e+00> : vector<4x128xf32>
    %161 = tpu.matmul %159, %160, %cst_88 {dimension_numbers = #tpu.dot_dimension_numbers<[1], [0], [0], [1], [0, 0, 1, 1], [], []>} : vector<4x400xf32>, vector<400x128xf32>, vector<4x128xf32> -> vector<4x128xf32>
    %c0_89 = arith.constant 0 : index
    %c0_90 = arith.constant 0 : index
    %c0_91 = arith.constant 0 : index
    %162 = vector.load %arg1[%c0_89, %c0_90, %c0_91] : memref<1x4x128xf32, #tpu.memory_space<vmem>>, vector<1x4x128xf32>
    %163 = vector.shape_cast %162 : vector<1x4x128xf32> to vector<4x128xf32>
    %c0_92 = arith.constant 0 : index
    %c0_93 = arith.constant 0 : index
    %c0_94 = arith.constant 0 : index
    %164 = vector.load %arg7[%c0_92, %c0_93, %c0_94] : memref<1x8x128xf32, #tpu.memory_space<vmem>>, vector<1x4x128xf32>
    %165 = vector.shape_cast %164 : vector<1x4x128xf32> to vector<4x128xf32>
    %166 = vector.shape_cast %163 : vector<4x128xf32> to vector<1x4x128xf32>
    tpu.vector_store %arg7[%c0_92, %c0_93, %c0_94], %166 {strides = array<i32>} : memref<1x8x128xf32, #tpu.memory_space<vmem>>, vector<1x4x128xf32>,
    %c0_95 = arith.constant 0 : index
    %c4_96 = arith.constant 4 : index
    %c0_97 = arith.constant 0 : index
    %167 = vector.load %arg7[%c0_95, %c4_96, %c0_97] : memref<1x8x128xf32, #tpu.memory_space<vmem>>, vector<1x4x128xf32>
    %168 = vector.shape_cast %167 : vector<1x4x128xf32> to vector<4x128xf32>
    %169 = vector.shape_cast %161 : vector<4x128xf32> to vector<1x4x128xf32>
    tpu.vector_store %arg7[%c0_95, %c4_96, %c0_97], %169 {strides = array<i32>} : memref<1x8x128xf32, #tpu.memory_space<vmem>>, vector<1x4x128xf32>,
    return
  }
  func.func @transform_0(%arg0: i32) -> (i32, i32, i32) {
    %c0_i32 = arith.constant 0 : i32
    %c0_i32_0 = arith.constant 0 : i32
    %c0_i32_1 = arith.constant 0 : i32
    return %arg0, %c0_i32, %c0_i32_0 : i32, i32, i32
  }
  func.func @transform_1(%arg0: i32) -> (i32, i32, i32) {
    %c0_i32 = arith.constant 0 : i32
    %c0_i32_0 = arith.constant 0 : i32
    %c0_i32_1 = arith.constant 0 : i32
    return %arg0, %c0_i32, %c0_i32_0 : i32, i32, i32
  }
  func.func @transform_2(%arg0: i32) -> (i32, i32) {
    %c0_i32 = arith.constant 0 : i32
    %c0_i32_0 = arith.constant 0 : i32
    %c0_i32_1 = arith.constant 0 : i32
    return %c0_i32, %c0_i32_0 : i32, i32
  }
  func.func @transform_3(%arg0: i32) -> (i32, i32) {
    %c0_i32 = arith.constant 0 : i32
    %c0_i32_0 = arith.constant 0 : i32
    %c0_i32_1 = arith.constant 0 : i32
    return %c0_i32, %c0_i32_0 : i32, i32
  }
  func.func @transform_4(%arg0: i32) -> (i32, i32) {
    %c0_i32 = arith.constant 0 : i32
    %c0_i32_0 = arith.constant 0 : i32
    %c0_i32_1 = arith.constant 0 : i32
    return %c0_i32, %c0_i32_0 : i32, i32
  }
  func.func @transform_5(%arg0: i32) -> (i32, i32, i32) {
    %c0_i32 = arith.constant 0 : i32
    %c0_i32_0 = arith.constant 0 : i32
    %c0_i32_1 = arith.constant 0 : i32
    %c0_i32_2 = arith.constant 0 : i32
    return %c0_i32, %c0_i32_0, %c0_i32_1 : i32, i32, i32
  }
  func.func @transform_6(%arg0: i32) -> (i32, i32, i32) {
    %c0_i32 = arith.constant 0 : i32
    %c0_i32_0 = arith.constant 0 : i32
    %c0_i32_1 = arith.constant 0 : i32
    return %arg0, %c0_i32, %c0_i32_0 : i32, i32, i32
  }
}

</mosaic_0001>

<llo_original>
// kernel: bottleneck_forward.2
$region0: #{bottleneck_forward.2}
  #allocation0 [shape = 'u32[]', space=smem, size = 0x4, offset = 0x4, fixed_abs, tag = 'smem constant byte address 0x4 - core index']
  #allocation1 [shape = 'u32[72,128]{1,0:T(1,128)}', space=vmem, size = 0x9000, scoped, tag = 'internal scratch']
  %s0 = inlined_call_operand.vmem [shape: f32[2,4,128], index: 0, kind: input, shape index: {}]
  %s1 = inlined_call_operand.vmem [shape: f32[4,1], index: 1, kind: input, shape index: {}]
  %s2 = inlined_call_operand.vmem [shape: f32[4,1], index: 2, kind: input, shape index: {}]
  %s3 = inlined_call_operand.vmem [shape: f32[16,4], index: 3, kind: input, shape index: {}]
  %s4 = inlined_call_operand.vmem [shape: f32[2,16,128], index: 4, kind: output, shape index: {0}]
  %s5 = inlined_call_operand.vmem [shape: f32[2,1,16,1], index: 5, kind: output, shape index: {1}]
  %s6 = inlined_call_operand.vmem [shape: f32[2,1,16,1], index: 6, kind: output, shape index: {2}]
  %7 = xla_tuple %s4, %s5, %s6
  %s8 = sld [smem:[#allocation0]]
  $region65: #{bottleneck_forward.2} parent=0
    _
  %s10 = ssub.s32 1, %s8
  %s11 = scalar_select 0, %s10, %s8
  loop: start=0, step=1, limit=4
  $region2: #{bottleneck_forward.2} parent=0 // loop_pre_header
    _
  $region3: #{bottleneck_forward.2} parent=0 // loop_header
    %s13 = sphi 0, %s17
    %p14 = scmp.ge.s32.totalorder %s13, 4
    %s20 = sphi 0, %s32
    %s21 = sphi 0, %s28
    %s22 = sphi 0, %s20
    %s23 = sphi 0, %s21
    %s24 = sphi 0, %s22
    %s25 = sphi 0, %s23
    %s37 = sphi 0, %s39
    %s40 = sphi 0, %s37
    %s41 = sphi 0, %s40
    %s57 = sphi 0, %s41
    %s61 = sphi 0, %s61
    %s63 = sphi 0, %s61
    %s64 = sphi 0, %s63
    %s78 = sphi 0, %s64
    %s82 = sphi 0, %s82
    %s84 = sphi 0, %s82
    %s85 = sphi 0, %s84
    %s99 = sphi 0, %s85
    %s103 = sphi 0, %s103
    %s105 = sphi 0, %s103
    %s106 = sphi 0, %s105
    %s120 = sphi 0, %s106
    %s128 = sphi 0, %s130
    %s131 = sphi 0, %s128
    %s132 = sphi 0, %s131
    %s148 = sphi 0, %s132
    %s156 = sphi 0, %s158
    %s159 = sphi 0, %s156
    %s160 = sphi 0, %s159
    %s176 = sphi 0, %s160
    %s184 = sphi 0, %s186
    %s187 = sphi 0, %s184
    %s188 = sphi 0, %s187
    %s204 = sphi 0, %s188
  $region4: #{bottleneck_forward.2} parent=0 // loop_header_branch
    %16 = sbr.rel (%p14) target = $region8
  $region5: #{bottleneck_forward.2} parent=0 // loop_body
    %s18 = ssub.s32 %s13, 1
    %s19 = ssub.s32 %s13, 2
    %s26 = sadd.s32 1, %s21
    %p27 = scmp.ge.s32.totalorder %s26, 1
    %s28 = scalar_select %p27, 0, %s26
    %s29 = sadd.s32 1, %s20
    %s30 = scalar_select %p27, %s29, %s20
    %p31 = scmp.ge.s32.totalorder %s30, 2
    %s32 = scalar_select %p31, 0, %s30
    %s33 = ssub.s32 %s20, %s32
    %s34 = ssub.s32 %s21, %s28
    %s35 = sor.u32 %s33, %s34
    %p36 = scmp.eq.s32.totalorder %s35, 0
    %s38 = sadd.s32 %s37, 1
    %s39 = scalar_select %p36, %s37, %s38
    %p42 = pneg %p36
    %p43 = scmp.eq.s32.totalorder %s13, 1
    %p44 = por %p42, %p43
    %p45 = scmp.ne.s32.totalorder %s37, %s40
    %p46 = scmp.eq.s32.totalorder %s13, 0
    %p47 = por %p45, %p46
    %p48 = scmp.ne.s32.totalorder %s37, %s40
    %p49 = scmp.eq.s32.totalorder %s18, 1
    %p50 = por %p48, %p49
    %p51 = scmp.ne.s32.totalorder %s40, %s41
    %p52 = scmp.eq.s32.totalorder %s18, 0
    %p53 = por %p51, %p52
    %p54 = scmp.ne.s32.totalorder %s40, %s41
    %p55 = scmp.eq.s32.totalorder %s19, 1
    %p56 = por %p54, %p55
    %p58 = scmp.ne.s32.totalorder %s41, %s57
    %p59 = scmp.eq.s32.totalorder %s19, 0
    %p60 = por %p58, %p59
    %s62 = sadd.s32 %s61, 1
    %p65 = scmp.eq.s32.totalorder %s13, 1
    %p66 = scmp.ne.s32.totalorder %s61, %s63
    %p67 = scmp.eq.s32.totalorder %s13, 0
    %p68 = por %p66, %p67
    %p69 = scmp.ne.s32.totalorder %s61, %s63
    %p70 = scmp.eq.s32.totalorder %s18, 1
    %p71 = por %p69, %p70
    %p72 = scmp.ne.s32.totalorder %s63, %s64
    %p73 = scmp.eq.s32.totalorder %s18, 0
    %p74 = por %p72, %p73
    %p75 = scmp.ne.s32.totalorder %s63, %s64
    %p76 = scmp.eq.s32.totalorder %s19, 1
    %p77 = por %p75, %p76
    %p79 = scmp.ne.s32.totalorder %s64, %s78
    %p80 = scmp.eq.s32.totalorder %s19, 0
    %p81 = por %p79, %p80
    %s83 = sadd.s32 %s82, 1
    %p86 = scmp.eq.s32.totalorder %s13, 1
    %p87 = scmp.ne.s32.totalorder %s82, %s84
    %p88 = scmp.eq.s32.totalorder %s13, 0
    %p89 = por %p87, %p88
    %p90 = scmp.ne.s32.totalorder %s82, %s84
    %p91 = scmp.eq.s32.totalorder %s18, 1
    %p92 = por %p90, %p91
    %p93 = scmp.ne.s32.totalorder %s84, %s85
    %p94 = scmp.eq.s32.totalorder %s18, 0
    %p95 = por %p93, %p94
    %p96 = scmp.ne.s32.totalorder %s84, %s85
    %p97 = scmp.eq.s32.totalorder %s19, 1
    %p98 = por %p96, %p97
    %p100 = scmp.ne.s32.totalorder %s85, %s99
    %p101 = scmp.eq.s32.totalorder %s19, 0
    %p102 = por %p100, %p101
    %s104 = sadd.s32 %s103, 1
    %p107 = scmp.eq.s32.totalorder %s13, 1
    %p108 = scmp.ne.s32.totalorder %s103, %s105
    %p109 = scmp.eq.s32.totalorder %s13, 0
    %p110 = por %p108, %p109
    %p111 = scmp.ne.s32.totalorder %s103, %s105
    %p112 = scmp.eq.s32.totalorder %s18, 1
    %p113 = por %p111, %p112
    %p114 = scmp.ne.s32.totalorder %s105, %s106
    %p115 = scmp.eq.s32.totalorder %s18, 0
    %p116 = por %p114, %p115
    %p117 = scmp.ne.s32.totalorder %s105, %s106
    %p118 = scmp.eq.s32.totalorder %s19, 1
    %p119 = por %p117, %p118
    %p121 = scmp.ne.s32.totalorder %s106, %s120
    %p122 = scmp.eq.s32.totalorder %s19, 0
    %p123 = por %p121, %p122
    %s124 = ssub.s32 %s20, %s32
    %s125 = ssub.s32 %s21, %s28
    %s126 = sor.u32 %s124, %s125
    %p127 = scmp.eq.s32.totalorder %s126, 0
    %s129 = sadd.s32 %s128, 1
    %s130 = scalar_select %p127, %s128, %s129
    %p133 = pneg %p127
    %p134 = scmp.eq.s32.totalorder %s13, 1
    %p135 = por %p133, %p134
    %p136 = scmp.ne.s32.totalorder %s128, %s131
    %p137 = scmp.eq.s32.totalorder %s13, 0
    %p138 = por %p136, %p137
    %p139 = scmp.ne.s32.totalorder %s128, %s131
    %p140 = scmp.eq.s32.totalorder %s18, 1
    %p141 = por %p139, %p140
    %p142 = scmp.ne.s32.totalorder %s131, %s132
    %p143 = scmp.eq.s32.totalorder %s18, 0
    %p144 = por %p142, %p143
    %p145 = scmp.ne.s32.totalorder %s131, %s132
    %p146 = scmp.eq.s32.totalorder %s19, 1
    %p147 = por %p145, %p146
    %p149 = scmp.ne.s32.totalorder %s132, %s148
    %p150 = scmp.eq.s32.totalorder %s19, 0
    %p151 = por %p149, %p150
    %s152 = ssub.s32 %s20, %s32
    %s153 = ssub.s32 %s21, %s28
    %s154 = sor.u32 %s152, %s153
    %p155 = scmp.eq.s32.totalorder %s154, 0
    %s157 = sadd.s32 %s156, 1
    %s158 = scalar_select %p155, %s156, %s157
    %p161 = pneg %p155
    %p162 = scmp.eq.s32.totalorder %s13, 1
    %p163 = por %p161, %p162
    %p164 = scmp.ne.s32.totalorder %s156, %s159
    %p165 = scmp.eq.s32.totalorder %s13, 0
    %p166 = por %p164, %p165
    %p167 = scmp.ne.s32.totalorder %s156, %s159
    %p168 = scmp.eq.s32.totalorder %s18, 1
    %p169 = por %p167, %p168
    %p170 = scmp.ne.s32.totalorder %s159, %s160
    %p171 = scmp.eq.s32.totalorder %s18, 0
    %p172 = por %p170, %p171
    %p173 = scmp.ne.s32.totalorder %s159, %s160
    %p174 = scmp.eq.s32.totalorder %s19, 1
    %p175 = por %p173, %p174
    %p177 = scmp.ne.s32.totalorder %s160, %s176
    %p178 = scmp.eq.s32.totalorder %s19, 0
    %p179 = por %p177, %p178
    %s180 = ssub.s32 %s20, %s32
    %s181 = ssub.s32 %s21, %s28
    %s182 = sor.u32 %s180, %s181
    %p183 = scmp.eq.s32.totalorder %s182, 0
    %s185 = sadd.s32 %s184, 1
    %s186 = scalar_select %p183, %s184, %s185
    %p189 = pneg %p183
    %p190 = scmp.eq.s32.totalorder %s13, 1
    %p191 = por %p189, %p190
    %p192 = scmp.ne.s32.totalorder %s184, %s187
    %p193 = scmp.eq.s32.totalorder %s13, 0
    %p194 = por %p192, %p193
    %p195 = scmp.ne.s32.totalorder %s184, %s187
    %p196 = scmp.eq.s32.totalorder %s18, 1
    %p197 = por %p195, %p196
    %p198 = scmp.ne.s32.totalorder %s187, %s188
    %p199 = scmp.eq.s32.totalorder %s18, 0
    %p200 = por %p198, %p199
    %p201 = scmp.ne.s32.totalorder %s187, %s188
    %p202 = scmp.eq.s32.totalorder %s19, 1
    %p203 = por %p201, %p202
    %p205 = scmp.ne.s32.totalorder %s188, %s204
    %p206 = scmp.eq.s32.totalorder %s19, 0
    %p207 = por %p205, %p206
    %p208 = scmp.le.s32.totalorder 1, %s13
    %p209 = scmp.lt.s32.totalorder %s13, 3
    %p210 = pnand %p208, %p209
    %p211 = pneg %p210
    // Predicated region
    $region9: #{bottleneck_forward.2} parent=5 // pred_check
      _
    $region10: #{bottleneck_forward.2} parent=5 // pred_check_branch
      %213 = sbr.rel (%p210) target = $region12
    $region11: #{bottleneck_forward.2} parent=5 // pred_region
      %s214 = ssub.s32 %s13, 1
      // Predicated region
      $region13: #{bottleneck_forward.2} parent=11 // pred_check
        %p215 = pneg %p74
      $region14: #{bottleneck_forward.2} parent=11 // pred_check_branch
        %217 = sbr.rel (%p215) target = $region16
      $region15: #{bottleneck_forward.2} parent=11 // pred_region
        _
      $region16: #{bottleneck_forward.2} parent=11 // pred_fallthru
        _
      // Predicated region
      $region17: #{bottleneck_forward.2} parent=11 // pred_check
        %p218 = pneg %p95
      $region18: #{bottleneck_forward.2} parent=11 // pred_check_branch
        %220 = sbr.rel (%p218) target = $region20
      $region19: #{bottleneck_forward.2} parent=11 // pred_region
        _
      $region20: #{bottleneck_forward.2} parent=11 // pred_fallthru
        _
      // Predicated region
      $region21: #{bottleneck_forward.2} parent=11 // pred_check
        %p221 = pneg %p116
      $region22: #{bottleneck_forward.2} parent=11 // pred_check_branch
        %223 = sbr.rel (%p221) target = $region24
      $region23: #{bottleneck_forward.2} parent=11 // pred_region
        _
      $region24: #{bottleneck_forward.2} parent=11 // pred_fallthru
        _
    $region12: #{bottleneck_forward.2} parent=5 // pred_fallthru
      _
    %p224 = scmp.lt.s32.totalorder %s13, 2
    // Predicated region
    $region25: #{bottleneck_forward.2} parent=5 // pred_check
      %p225 = pneg %p224
    $region26: #{bottleneck_forward.2} parent=5 // pred_check_branch
      %227 = sbr.rel (%p225) target = $region28
    $region27: #{bottleneck_forward.2} parent=5 // pred_region
      // Predicated region
      $region29: #{bottleneck_forward.2} parent=27 // pred_check
        %p228 = pneg %p47
      $region30: #{bottleneck_forward.2} parent=27 // pred_check_branch
        %230 = sbr.rel (%p228) target = $region32
      $region31: #{bottleneck_forward.2} parent=27 // pred_region
        %p231 = scmp.lt.s32.totalorder %s20, 1
        %s232 = scalar_select %p231, %s20, 1
        %p233 = scmp.lt.s32.totalorder %s21, 0
        %s234 = scalar_select %p233, %s21, 0
        %s235 = sadd.s32 %s234, %s232
        %s236 = smul.addr %s235, 4
        %s237 = scalar_lea.vmem %s0, %s236
      $region32: #{bottleneck_forward.2} parent=27 // pred_fallthru
        _
    $region28: #{bottleneck_forward.2} parent=5 // pred_fallthru
      _
    %p238 = scmp.le.s32.totalorder 1, %s13
    %p239 = scmp.lt.s32.totalorder %s13, 3
    %p240 = pnand %p238, %p239
    %p241 = pneg %p240
    // Predicated region
    $region33: #{bottleneck_forward.2} parent=5 // pred_check
      _
    $region34: #{bottleneck_forward.2} parent=5 // pred_check_branch
      %243 = sbr.rel (%p240) target = $region36
    $region35: #{bottleneck_forward.2} parent=5 // pred_region
      %s244 = ssub.s32 %s13, 1
      %p245 = scmp.lt.s32.totalorder %s22, 1
      %s246 = scalar_select %p245, %s22, 1
      %p247 = scmp.lt.s32.totalorder %s23, 0
      %s248 = scalar_select %p247, %s23, 0
      %s249 = sadd.s32 %s248, %s246
      %s250 = smul.addr %s249, 4
      %s251 = scalar_lea.vmem %s0, %s250
      %p252 = pneg %p53
      %p253 = pneg %p50
      %p254 = pneg %p74
      %p255 = pneg %p71
      %p256 = pneg %p95
      %p257 = pneg %p92
      %p258 = pneg %p116
      %p259 = pneg %p113
      %p260 = pneg %p144
      %p261 = pneg %p141
      %p262 = scmp.lt.s32.totalorder %s22, 1
      %s263 = scalar_select %p262, %s22, 1
      %p264 = scmp.lt.s32.totalorder %s23, 0
      %s265 = scalar_select %p264, %s23, 0
      %s266 = smul.addr %s263, 2
      %s267 = sadd.s32 %s265, %s266
      %s268 = smul.addr %s267, 8
      %s269 = scalar_lea.vmem %s4, %s268
      %p270 = pneg %p172
      %p271 = pneg %p169
      %p272 = scmp.lt.s32.totalorder %s22, 1
      %s273 = scalar_select %p272, %s22, 1
      %p274 = scmp.lt.s32.totalorder %s23, 0
      %s275 = scalar_select %p274, %s23, 0
      %s276 = smul.addr %s275, 2
      %s277 = smul.addr %s273, 2
      %s278 = sadd.s32 %s276, %s277
      %s279 = smul.addr %s278, 8
      %s280 = scalar_lea.vmem %s5, %s279
      %p281 = pneg %p200
      %p282 = pneg %p197
      %p283 = scmp.lt.s32.totalorder %s22, 1
      %s284 = scalar_select %p283, %s22, 1
      %p285 = scmp.lt.s32.totalorder %s23, 0
      %s286 = scalar_select %p285, %s23, 0
      %s287 = smul.addr %s286, 2
      %s288 = smul.addr %s284, 2
      %s289 = sadd.s32 %s287, %s288
      %s290 = smul.addr %s289, 8
      %s291 = scalar_lea.vmem %s6, %s290
      %p292 = scmp.lt.s32.totalorder %s22, 1
      %s293 = scalar_select %p292, %s22, 1
      %p294 = scmp.lt.s32.totalorder %s23, 0
      %s295 = scalar_select %p294, %s23, 0
      %s296 = sadd.s32 %s295, %s293
      %s297 = smul.addr %s296, 4
      %s298 = scalar_lea.vmem %s0, %s297
      %p299 = scmp.lt.s32.totalorder %s22, 1
      %s300 = scalar_select %p299, %s22, 1
      %p301 = scmp.lt.s32.totalorder %s23, 0
      %s302 = scalar_select %p301, %s23, 0
      %s303 = smul.addr %s300, 2
      %s304 = sadd.s32 %s302, %s303
      %s305 = smul.addr %s304, 8
      %s306 = scalar_lea.vmem %s4, %s305
      %p307 = scmp.lt.s32.totalorder %s22, 1
      %s308 = scalar_select %p307, %s22, 1
      %p309 = scmp.lt.s32.totalorder %s23, 0
      %s310 = scalar_select %p309, %s23, 0
      %s311 = smul.addr %s310, 2
      %s312 = smul.addr %s308, 2
      %s313 = sadd.s32 %s311, %s312
      %s314 = smul.addr %s313, 8
      %s315 = scalar_lea.vmem %s5, %s314
      %p316 = scmp.lt.s32.totalorder %s22, 1
      %s317 = scalar_select %p316, %s22, 1
      %p318 = scmp.lt.s32.totalorder %s23, 0
      %s319 = scalar_select %p318, %s23, 0
      %s320 = smul.addr %s319, 2
      %s321 = smul.addr %s317, 2
      %s322 = sadd.s32 %s320, %s321
      %s323 = smul.addr %s322, 8
      %s324 = scalar_lea.vmem %s6, %s323
      %v325 = vld [vmem:[%s298] sm:$0xf]
      %v326 = vld [vmem:[%s1] sm:$0xf]
      %328 = vset.pattern.permute.xlu0 0
      %329 = vperm.xlu0 %328, %v326
      %v330 = vpop.permute.xlu0 %329
      %v332 = vmul.f32 %v325, %v330
      %v333 = vld [vmem:[%s2] sm:$0xf]
      %335 = vset.pattern.permute.xlu0 0
      %336 = vperm.xlu0 %335, %v333
      %v337 = vpop.permute.xlu0 %336
      %v339 = vadd.f32 %v332, %v337
      %v340 = vmax.f32 %v339, 0.0
      %v341 = vld [vmem:[%s3] sm:$0xff]
      %v342 = vld [vmem:[%s3 + $0x8] sm:$0xff]
      %vm343 = vcmask 31744
      %v345 = vsel %vm343, %v341, 0
      %v348 = vsel %vm343, %v342, 0
      %vm350 = vcmask 1043456
      %v352 = vsel %vm350, %v340, 0
      %354 = vmatpush.msra.mxu0 0.0
      %355 = vmatpush.msra.mxu0 0.0
      %356 = vmatpush.msra.mxu0 0.0
      %357 = vmatpush.msra.mxu0 0.0
      %358 = vmatpush.msra.mxu0 0.0
      %359 = vmatpush.msra.mxu0 0.0
      %360 = vmatpush.msra.mxu0 0.0
      %361 = vmatpush.msra.mxu0 0.0
      %362 = vmatpush.msra.mxu0 0.0
      %363 = vmatpush.msra.mxu0 0.0
      %364 = vmatpush.msra.mxu0 0.0
      %365 = vmatpush.msra.mxu0 0.0
      %366 = vmatpush.msra.mxu0 0.0
      %367 = vmatpush.msra.mxu0 0.0
      %368 = vmatpush.msra.mxu0 0.0
      %369 = vmatpush.msra.mxu0 %v352
      %370 = vmatmul.f32.gmra.mxu0 %v345
      %v371 = vpop.f32.mrf.mxu0
      %v372 = vadd.f32 0.0, %v371
      %373 = vmatmul.f32.gmra.mxu0 %v348
      %v374 = vpop.f32.mrf.mxu0
      %v375 = vadd.f32 0.0, %v374
      %376 = vdwg.mxu0
      %377 = vst [vmem:[%s306] sm:$0xff] %v372
      %378 = vst [vmem:[%s306 + $0x8] sm:$0xff] %v375
      %379 = vadd.xlane.f32.xlu0 %v372
      %v380 = vpop.xlane.xlu0 %379
      %381 = vadd.xlane.f32.xlu0 %v375
      %v382 = vpop.xlane.xlu0 %381
      %vm383 = vcmask 7168
      %384 = vst.msk [vmem:[%s315] sm:$0xff] %vm383, %v380
      %385 = vst.msk [vmem:[%s315 + $0x8] sm:$0xff] %vm383, %v382
      %v386 = vmul.f32 %v372, %v372
      %v387 = vmul.f32 %v375, %v375
      %388 = vadd.xlane.f32.xlu0 %v386
      %v389 = vpop.xlane.xlu0 %388
      %390 = vadd.xlane.f32.xlu0 %v387
      %v391 = vpop.xlane.xlu0 %390
      %392 = vst.msk [vmem:[%s324] sm:$0xff] %vm383, %v389
      %393 = vst.msk [vmem:[%s324 + $0x8] sm:$0xff] %vm383, %v391
      %p394 = scmp.lt.s32.totalorder %s22, 1
      %s395 = scalar_select %p394, %s22, 1
      %p396 = scmp.lt.s32.totalorder %s23, 0
      %s397 = scalar_select %p396, %s23, 0
      %s398 = smul.addr %s395, 2
      %s399 = sadd.s32 %s397, %s398
      %s400 = smul.addr %s399, 8
      %s401 = scalar_lea.vmem %s4, %s400
      %p402 = scmp.lt.s32.totalorder %s22, 1
      %s403 = scalar_select %p402, %s22, 1
      %p404 = scmp.lt.s32.totalorder %s23, 0
      %s405 = scalar_select %p404, %s23, 0
      %s406 = smul.addr %s405, 2
      %s407 = smul.addr %s403, 2
      %s408 = sadd.s32 %s406, %s407
      %s409 = smul.addr %s408, 8
      %s410 = scalar_lea.vmem %s5, %s409
      %p411 = scmp.lt.s32.totalorder %s22, 1
      %s412 = scalar_select %p411, %s22, 1
      %p413 = scmp.lt.s32.totalorder %s23, 0
      %s414 = scalar_select %p413, %s23, 0
      %s415 = smul.addr %s414, 2
      %s416 = smul.addr %s412, 2
      %s417 = sadd.s32 %s415, %s416
      %s418 = smul.addr %s417, 8
      %s419 = scalar_lea.vmem %s6, %s418
      // Predicated region
      $region37: #{bottleneck_forward.2} parent=35 // pred_check
        %p420 = pneg %p141
      $region38: #{bottleneck_forward.2} parent=35 // pred_check_branch
        %422 = sbr.rel (%p420) target = $region40
      $region39: #{bottleneck_forward.2} parent=35 // pred_region
        _
      $region40: #{bottleneck_forward.2} parent=35 // pred_fallthru
        _
      // Predicated region
      $region41: #{bottleneck_forward.2} parent=35 // pred_check
        %p423 = pneg %p169
      $region42: #{bottleneck_forward.2} parent=35 // pred_check_branch
        %425 = sbr.rel (%p423) target = $region44
      $region43: #{bottleneck_forward.2} parent=35 // pred_region
        _
      $region44: #{bottleneck_forward.2} parent=35 // pred_fallthru
        _
      // Predicated region
      $region45: #{bottleneck_forward.2} parent=35 // pred_check
        %p426 = pneg %p197
      $region46: #{bottleneck_forward.2} parent=35 // pred_check_branch
        %428 = sbr.rel (%p426) target = $region48
      $region47: #{bottleneck_forward.2} parent=35 // pred_region
        _
      $region48: #{bottleneck_forward.2} parent=35 // pred_fallthru
        _
    $region36: #{bottleneck_forward.2} parent=5 // pred_fallthru
      _
    %p429 = scmp.le.s32.totalorder 2, %s13
    // Predicated region
    $region49: #{bottleneck_forward.2} parent=5 // pred_check
      %p430 = pneg %p429
    $region50: #{bottleneck_forward.2} parent=5 // pred_check_branch
      %432 = sbr.rel (%p430) target = $region52
    $region51: #{bottleneck_forward.2} parent=5 // pred_region
      %s433 = ssub.s32 %s13, 2
      // Predicated region
      $region53: #{bottleneck_forward.2} parent=51 // pred_check
        %p434 = pneg %p147
      $region54: #{bottleneck_forward.2} parent=51 // pred_check_branch
        %436 = sbr.rel (%p434) target = $region56
      $region55: #{bottleneck_forward.2} parent=51 // pred_region
        %p437 = scmp.lt.s32.totalorder %s24, 1
        %s438 = scalar_select %p437, %s24, 1
        %p439 = scmp.lt.s32.totalorder %s25, 0
        %s440 = scalar_select %p439, %s25, 0
        %s441 = smul.addr %s438, 2
        %s442 = sadd.s32 %s440, %s441
        %s443 = smul.addr %s442, 8
        %s444 = scalar_lea.vmem %s4, %s443
      $region56: #{bottleneck_forward.2} parent=51 // pred_fallthru
        _
      // Predicated region
      $region57: #{bottleneck_forward.2} parent=51 // pred_check
        %p445 = pneg %p175
      $region58: #{bottleneck_forward.2} parent=51 // pred_check_branch
        %447 = sbr.rel (%p445) target = $region60
      $region59: #{bottleneck_forward.2} parent=51 // pred_region
        %p448 = scmp.lt.s32.totalorder %s24, 1
        %s449 = scalar_select %p448, %s24, 1
        %p450 = scmp.lt.s32.totalorder %s25, 0
        %s451 = scalar_select %p450, %s25, 0
        %s452 = smul.addr %s451, 2
        %s453 = smul.addr %s449, 2
        %s454 = sadd.s32 %s452, %s453
        %s455 = smul.addr %s454, 8
        %s456 = scalar_lea.vmem %s5, %s455
      $region60: #{bottleneck_forward.2} parent=51 // pred_fallthru
        _
      // Predicated region
      $region61: #{bottleneck_forward.2} parent=51 // pred_check
        %p457 = pneg %p203
      $region62: #{bottleneck_forward.2} parent=51 // pred_check_branch
        %459 = sbr.rel (%p457) target = $region64
      $region63: #{bottleneck_forward.2} parent=51 // pred_region
        %p460 = scmp.lt.s32.totalorder %s24, 1
        %s461 = scalar_select %p460, %s24, 1
        %p462 = scmp.lt.s32.totalorder %s25, 0
        %s463 = scalar_select %p462, %s25, 0
        %s464 = smul.addr %s463, 2
        %s465 = smul.addr %s461, 2
        %s466 = sadd.s32 %s464, %s465
        %s467 = smul.addr %s466, 8
        %s468 = scalar_lea.vmem %s6, %s467
      $region64: #{bottleneck_forward.2} parent=51 // pred_fallthru
        _
    $region52: #{bottleneck_forward.2} parent=5 // pred_fallthru
      _
  $region6: #{bottleneck_forward.2} parent=0 // loop_footer
    %s17 = sadd.s32 1, %s13
  $region7: #{bottleneck_forward.2} parent=0 // loop_footer_branch
    %12 = sbr.rel target = $region3
  $region8: #{bottleneck_forward.2} parent=0 // loop_exit
    _

// kernel: bottleneck_forward.3
$region0: #{bottleneck_forward.3}
  #allocation0 [shape = 'u32[]', space=smem, size = 0x4, offset = 0x4, fixed_abs, tag = 'smem constant byte address 0x4 - core index']
  #allocation1 [shape = 'u32[72,128]{1,0:T(1,128)}', space=vmem, size = 0x9000, scoped, tag = 'internal scratch']
  #allocation2 [shape = 'f32[400,128]{1,0:T(8,128)}', space=vmem, size = 0x32000, scoped, tag = 'scratch operand']
  %s0 = inlined_call_operand.vmem [shape: f32[2,4,128], index: 0, kind: input, shape index: {}]
  %s1 = inlined_call_operand.vmem [shape: f32[2,16,128], index: 1, kind: input, shape index: {}]
  %s2 = inlined_call_operand.vmem [shape: f32[16,1], index: 2, kind: input, shape index: {}]
  %s3 = inlined_call_operand.vmem [shape: f32[16,1], index: 3, kind: input, shape index: {}]
  %s4 = inlined_call_operand.vmem [shape: f32[4,400], index: 4, kind: input, shape index: {}]
  %s5 = inlined_call_operand.vmem [shape: f32[25,1,128], index: 5, kind: input, shape index: {}]
  %s6 = inlined_call_operand.vmem [shape: f32[2,8,128], index: 6, kind: output, shape index: {}]
  %s7 = sld [smem:[#allocation0]]
  $region57: #{bottleneck_forward.3} parent=0
    _
  %s9 = ssub.s32 1, %s7
  %s10 = scalar_select 0, %s9, %s7
  loop: start=0, step=1, limit=4
  $region2: #{bottleneck_forward.3} parent=0 // loop_pre_header
    _
  $region3: #{bottleneck_forward.3} parent=0 // loop_header
    %s12 = sphi 0, %s16
    %p13 = scmp.ge.s32.totalorder %s12, 4
    %s22 = sphi 0, %s24
    %s25 = sphi 0, %s22
    %s26 = sphi 0, %s25
    %s42 = sphi 0, %s26
    %s48 = sphi 0, %s50
    %s51 = sphi 0, %s48
    %s52 = sphi 0, %s51
    %s68 = sphi 0, %s52
    %s72 = sphi 0, %s72
    %s74 = sphi 0, %s72
    %s75 = sphi 0, %s74
    %s89 = sphi 0, %s75
    %s93 = sphi 0, %s93
    %s95 = sphi 0, %s93
    %s96 = sphi 0, %s95
    %s110 = sphi 0, %s96
    %s114 = sphi 0, %s114
    %s116 = sphi 0, %s114
    %s117 = sphi 0, %s116
    %s131 = sphi 0, %s117
    %s135 = sphi 0, %s135
    %s137 = sphi 0, %s135
    %s138 = sphi 0, %s137
    %s152 = sphi 0, %s138
    %s158 = sphi 0, %s160
    %s161 = sphi 0, %s158
    %s162 = sphi 0, %s161
    %s178 = sphi 0, %s162
  $region4: #{bottleneck_forward.3} parent=0 // loop_header_branch
    %15 = sbr.rel (%p13) target = $region8
  $region5: #{bottleneck_forward.3} parent=0 // loop_body
    %s17 = ssub.s32 %s12, 1
    %s18 = ssub.s32 %s12, 2
    %s19 = sadd.s32 %s12, 1
    %s20 = ssub.s32 %s12, %s19
    %p21 = scmp.eq.s32.totalorder %s20, 0
    %s23 = sadd.s32 %s22, 1
    %s24 = scalar_select %p21, %s22, %s23
    %p27 = pneg %p21
    %p28 = scmp.eq.s32.totalorder %s12, 1
    %p29 = por %p27, %p28
    %p30 = scmp.ne.s32.totalorder %s22, %s25
    %p31 = scmp.eq.s32.totalorder %s12, 0
    %p32 = por %p30, %p31
    %p33 = scmp.ne.s32.totalorder %s22, %s25
    %p34 = scmp.eq.s32.totalorder %s17, 1
    %p35 = por %p33, %p34
    %p36 = scmp.ne.s32.totalorder %s25, %s26
    %p37 = scmp.eq.s32.totalorder %s17, 0
    %p38 = por %p36, %p37
    %p39 = scmp.ne.s32.totalorder %s25, %s26
    %p40 = scmp.eq.s32.totalorder %s18, 1
    %p41 = por %p39, %p40
    %p43 = scmp.ne.s32.totalorder %s26, %s42
    %p44 = scmp.eq.s32.totalorder %s18, 0
    %p45 = por %p43, %p44
    %s46 = ssub.s32 %s12, %s19
    %p47 = scmp.eq.s32.totalorder %s46, 0
    %s49 = sadd.s32 %s48, 1
    %s50 = scalar_select %p47, %s48, %s49
    %p53 = pneg %p47
    %p54 = scmp.eq.s32.totalorder %s12, 1
    %p55 = por %p53, %p54
    %p56 = scmp.ne.s32.totalorder %s48, %s51
    %p57 = scmp.eq.s32.totalorder %s12, 0
    %p58 = por %p56, %p57
    %p59 = scmp.ne.s32.totalorder %s48, %s51
    %p60 = scmp.eq.s32.totalorder %s17, 1
    %p61 = por %p59, %p60
    %p62 = scmp.ne.s32.totalorder %s51, %s52
    %p63 = scmp.eq.s32.totalorder %s17, 0
    %p64 = por %p62, %p63
    %p65 = scmp.ne.s32.totalorder %s51, %s52
    %p66 = scmp.eq.s32.totalorder %s18, 1
    %p67 = por %p65, %p66
    %p69 = scmp.ne.s32.totalorder %s52, %s68
    %p70 = scmp.eq.s32.totalorder %s18, 0
    %p71 = por %p69, %p70
    %s73 = sadd.s32 %s72, 1
    %p76 = scmp.eq.s32.totalorder %s12, 1
    %p77 = scmp.ne.s32.totalorder %s72, %s74
    %p78 = scmp.eq.s32.totalorder %s12, 0
    %p79 = por %p77, %p78
    %p80 = scmp.ne.s32.totalorder %s72, %s74
    %p81 = scmp.eq.s32.totalorder %s17, 1
    %p82 = por %p80, %p81
    %p83 = scmp.ne.s32.totalorder %s74, %s75
    %p84 = scmp.eq.s32.totalorder %s17, 0
    %p85 = por %p83, %p84
    %p86 = scmp.ne.s32.totalorder %s74, %s75
    %p87 = scmp.eq.s32.totalorder %s18, 1
    %p88 = por %p86, %p87
    %p90 = scmp.ne.s32.totalorder %s75, %s89
    %p91 = scmp.eq.s32.totalorder %s18, 0
    %p92 = por %p90, %p91
    %s94 = sadd.s32 %s93, 1
    %p97 = scmp.eq.s32.totalorder %s12, 1
    %p98 = scmp.ne.s32.totalorder %s93, %s95
    %p99 = scmp.eq.s32.totalorder %s12, 0
    %p100 = por %p98, %p99
    %p101 = scmp.ne.s32.totalorder %s93, %s95
    %p102 = scmp.eq.s32.totalorder %s17, 1
    %p103 = por %p101, %p102
    %p104 = scmp.ne.s32.totalorder %s95, %s96
    %p105 = scmp.eq.s32.totalorder %s17, 0
    %p106 = por %p104, %p105
    %p107 = scmp.ne.s32.totalorder %s95, %s96
    %p108 = scmp.eq.s32.totalorder %s18, 1
    %p109 = por %p107, %p108
    %p111 = scmp.ne.s32.totalorder %s96, %s110
    %p112 = scmp.eq.s32.totalorder %s18, 0
    %p113 = por %p111, %p112
    %s115 = sadd.s32 %s114, 1
    %p118 = scmp.eq.s32.totalorder %s12, 1
    %p119 = scmp.ne.s32.totalorder %s114, %s116
    %p120 = scmp.eq.s32.totalorder %s12, 0
    %p121 = por %p119, %p120
    %p122 = scmp.ne.s32.totalorder %s114, %s116
    %p123 = scmp.eq.s32.totalorder %s17, 1
    %p124 = por %p122, %p123
    %p125 = scmp.ne.s32.totalorder %s116, %s117
    %p126 = scmp.eq.s32.totalorder %s17, 0
    %p127 = por %p125, %p126
    %p128 = scmp.ne.s32.totalorder %s116, %s117
    %p129 = scmp.eq.s32.totalorder %s18, 1
    %p130 = por %p128, %p129
    %p132 = scmp.ne.s32.totalorder %s117, %s131
    %p133 = scmp.eq.s32.totalorder %s18, 0
    %p134 = por %p132, %p133
    %s136 = sadd.s32 %s135, 1
    %p139 = scmp.eq.s32.totalorder %s12, 1
    %p140 = scmp.ne.s32.totalorder %s135, %s137
    %p141 = scmp.eq.s32.totalorder %s12, 0
    %p142 = por %p140, %p141
    %p143 = scmp.ne.s32.totalorder %s135, %s137
    %p144 = scmp.eq.s32.totalorder %s17, 1
    %p145 = por %p143, %p144
    %p146 = scmp.ne.s32.totalorder %s137, %s138
    %p147 = scmp.eq.s32.totalorder %s17, 0
    %p148 = por %p146, %p147
    %p149 = scmp.ne.s32.totalorder %s137, %s138
    %p150 = scmp.eq.s32.totalorder %s18, 1
    %p151 = por %p149, %p150
    %p153 = scmp.ne.s32.totalorder %s138, %s152
    %p154 = scmp.eq.s32.totalorder %s18, 0
    %p155 = por %p153, %p154
    %s156 = ssub.s32 %s12, %s19
    %p157 = scmp.eq.s32.totalorder %s156, 0
    %s159 = sadd.s32 %s158, 1
    %s160 = scalar_select %p157, %s158, %s159
    %p163 = pneg %p157
    %p164 = scmp.eq.s32.totalorder %s12, 1
    %p165 = por %p163, %p164
    %p166 = scmp.ne.s32.totalorder %s158, %s161
    %p167 = scmp.eq.s32.totalorder %s12, 0
    %p168 = por %p166, %p167
    %p169 = scmp.ne.s32.totalorder %s158, %s161
    %p170 = scmp.eq.s32.totalorder %s17, 1
    %p171 = por %p169, %p170
    %p172 = scmp.ne.s32.totalorder %s161, %s162
    %p173 = scmp.eq.s32.totalorder %s17, 0
    %p174 = por %p172, %p173
    %p175 = scmp.ne.s32.totalorder %s161, %s162
    %p176 = scmp.eq.s32.totalorder %s18, 1
    %p177 = por %p175, %p176
    %p179 = scmp.ne.s32.totalorder %s162, %s178
    %p180 = scmp.eq.s32.totalorder %s18, 0
    %p181 = por %p179, %p180
    %p182 = scmp.le.s32.totalorder 1, %s12
    %p183 = scmp.lt.s32.totalorder %s12, 3
    %p184 = pnand %p182, %p183
    %p185 = pneg %p184
    // Predicated region
    $region9: #{bottleneck_forward.3} parent=5 // pred_check
      _
    $region10: #{bottleneck_forward.3} parent=5 // pred_check_branch
      %187 = sbr.rel (%p184) target = $region12
    $region11: #{bottleneck_forward.3} parent=5 // pred_region
      %s188 = ssub.s32 %s12, 1
      // Predicated region
      $region13: #{bottleneck_forward.3} parent=11 // pred_check
        %p189 = pneg %p85
      $region14: #{bottleneck_forward.3} parent=11 // pred_check_branch
        %191 = sbr.rel (%p189) target = $region16
      $region15: #{bottleneck_forward.3} parent=11 // pred_region
        _
      $region16: #{bottleneck_forward.3} parent=11 // pred_fallthru
        _
      // Predicated region
      $region17: #{bottleneck_forward.3} parent=11 // pred_check
        %p192 = pneg %p106
      $region18: #{bottleneck_forward.3} parent=11 // pred_check_branch
        %194 = sbr.rel (%p192) target = $region20
      $region19: #{bottleneck_forward.3} parent=11 // pred_region
        _
      $region20: #{bottleneck_forward.3} parent=11 // pred_fallthru
        _
      // Predicated region
      $region21: #{bottleneck_forward.3} parent=11 // pred_check
        %p195 = pneg %p127
      $region22: #{bottleneck_forward.3} parent=11 // pred_check_branch
        %197 = sbr.rel (%p195) target = $region24
      $region23: #{bottleneck_forward.3} parent=11 // pred_region
        _
      $region24: #{bottleneck_forward.3} parent=11 // pred_fallthru
        _
      // Predicated region
      $region25: #{bottleneck_forward.3} parent=11 // pred_check
        %p198 = pneg %p148
      $region26: #{bottleneck_forward.3} parent=11 // pred_check_branch
        %200 = sbr.rel (%p198) target = $region28
      $region27: #{bottleneck_forward.3} parent=11 // pred_region
        _
      $region28: #{bottleneck_forward.3} parent=11 // pred_fallthru
        _
    $region12: #{bottleneck_forward.3} parent=5 // pred_fallthru
      _
    %p201 = scmp.lt.s32.totalorder %s12, 2
    // Predicated region
    $region29: #{bottleneck_forward.3} parent=5 // pred_check
      %p202 = pneg %p201
    $region30: #{bottleneck_forward.3} parent=5 // pred_check_branch
      %204 = sbr.rel (%p202) target = $region32
    $region31: #{bottleneck_forward.3} parent=5 // pred_region
      // Predicated region
      $region33: #{bottleneck_forward.3} parent=31 // pred_check
        %p205 = pneg %p32
      $region34: #{bottleneck_forward.3} parent=31 // pred_check_branch
        %207 = sbr.rel (%p205) target = $region36
      $region35: #{bottleneck_forward.3} parent=31 // pred_region
        %p208 = scmp.lt.s32.totalorder %s12, 1
        %s209 = scalar_select %p208, %s12, 1
        %s210 = smul.addr %s209, 4
        %s211 = scalar_lea.vmem %s0, %s210
      $region36: #{bottleneck_forward.3} parent=31 // pred_fallthru
        _
      // Predicated region
      $region37: #{bottleneck_forward.3} parent=31 // pred_check
        %p212 = pneg %p58
      $region38: #{bottleneck_forward.3} parent=31 // pred_check_branch
        %214 = sbr.rel (%p212) target = $region40
      $region39: #{bottleneck_forward.3} parent=31 // pred_region
        %p215 = scmp.lt.s32.totalorder %s12, 1
        %s216 = scalar_select %p215, %s12, 1
        %s217 = smul.addr %s216, 2
        %s218 = smul.addr %s217, 8
        %s219 = scalar_lea.vmem %s1, %s218
      $region40: #{bottleneck_forward.3} parent=31 // pred_fallthru
        _
    $region32: #{bottleneck_forward.3} parent=5 // pred_fallthru
      _
    %p220 = scmp.le.s32.totalorder 1, %s12
    %p221 = scmp.lt.s32.totalorder %s12, 3
    %p222 = pnand %p220, %p221
    %p223 = pneg %p222
    // Predicated region
    $region41: #{bottleneck_forward.3} parent=5 // pred_check
      _
    $region42: #{bottleneck_forward.3} parent=5 // pred_check_branch
      %225 = sbr.rel (%p222) target = $region44
    $region43: #{bottleneck_forward.3} parent=5 // pred_region
      %s226 = ssub.s32 %s12, 1
      %p227 = scmp.lt.s32.totalorder %s17, 1
      %s228 = scalar_select %p227, %s17, 1
      %s229 = smul.addr %s228, 4
      %s230 = scalar_lea.vmem %s0, %s229
      %p231 = pneg %p38
      %p232 = pneg %p35
      %p233 = scmp.lt.s32.totalorder %s17, 1
      %s234 = scalar_select %p233, %s17, 1
      %s235 = smul.addr %s234, 2
      %s236 = smul.addr %s235, 8
      %s237 = scalar_lea.vmem %s1, %s236
      %p238 = pneg %p64
      %p239 = pneg %p61
      %p240 = pneg %p85
      %p241 = pneg %p82
      %p242 = pneg %p106
      %p243 = pneg %p103
      %p244 = pneg %p127
      %p245 = pneg %p124
      %p246 = pneg %p148
      %p247 = pneg %p145
      %p248 = pneg %p174
      %p249 = pneg %p171
      %p250 = scmp.lt.s32.totalorder %s17, 1
      %s251 = scalar_select %p250, %s17, 1
      %s252 = smul.addr %s251, 8
      %s253 = scalar_lea.vmem %s6, %s252
      %p254 = scmp.lt.s32.totalorder %s17, 1
      %s255 = scalar_select %p254, %s17, 1
      %s256 = smul.addr %s255, 4
      %s257 = scalar_lea.vmem %s0, %s256
      %p258 = scmp.lt.s32.totalorder %s17, 1
      %s259 = scalar_select %p258, %s17, 1
      %s260 = smul.addr %s259, 2
      %s261 = smul.addr %s260, 8
      %s262 = scalar_lea.vmem %s1, %s261
      %p263 = scmp.lt.s32.totalorder %s17, 1
      %s264 = scalar_select %p263, %s17, 1
      %s265 = smul.addr %s264, 8
      %s266 = scalar_lea.vmem %s6, %s265
      %v267 = vld [vmem:[%s262] sm:$0xff]
      %v268 = vld [vmem:[%s262 + $0x8] sm:$0xff]
      %v269 = vld [vmem:[%s2] sm:$0xff]
      %v270 = vld [vmem:[%s2 + $0x8] sm:$0xff]
      %272 = vset.pattern.permute.xlu0 0
      %273 = vperm.xlu0 %272, %v269
      %v274 = vpop.permute.xlu0 %273
      %277 = vset.pattern.permute.xlu0 0
      %278 = vperm.xlu0 %277, %v270
      %v279 = vpop.permute.xlu0 %278
      %v281 = vmul.f32 %v267, %v274
      %v282 = vmul.f32 %v268, %v279
      %v283 = vld [vmem:[%s3] sm:$0xff]
      %v284 = vld [vmem:[%s3 + $0x8] sm:$0xff]
      %286 = vset.pattern.permute.xlu0 0
      %287 = vperm.xlu0 %286, %v283
      %v288 = vpop.permute.xlu0 %287
      %291 = vset.pattern.permute.xlu0 0
      %292 = vperm.xlu0 %291, %v284
      %v293 = vpop.permute.xlu0 %292
      %v295 = vadd.f32 %v281, %v288
      %v296 = vadd.f32 %v282, %v293
      %v297 = vmax.f32 %v295, 0.0
      %v298 = vmax.f32 %v296, 0.0
      %299 = vrot.lane.b32.xlu0 %v297, 12
      %v300 = vpop.permute.xlu0 %299
      %301 = vrot.lane.b32.xlu0 %v298, 12
      %v302 = vpop.permute.xlu0 %301
      %v303 = vld [vmem:[%s5] sm:$0x1]
      %v305 = vperm.slane %v303, 0
      %v307 = vmul.f32 %v300, %v305
      %v308 = vmul.f32 %v302, %v305
      %309 = vst [vmem:[#allocation2] sm:$0xff] %v307
      %310 = vst [vmem:[#allocation2 + $0x8] sm:$0xff] %v308
      %311 = vrot.lane.b32.xlu0 %v297, 11
      %v312 = vpop.permute.xlu0 %311
      %313 = vrot.lane.b32.xlu0 %v298, 11
      %v314 = vpop.permute.xlu0 %313
      %s315 = scalar_lea.vmem %s5, 1
      %v316 = vld [vmem:[%s315] sm:$0x1]
      %v318 = vperm.slane %v316, 0
      %v320 = vmul.f32 %v312, %v318
      %v321 = vmul.f32 %v314, %v318
      %322 = vst [vmem:[#allocation2 + $0x10] sm:$0xff] %v320
      %323 = vst [vmem:[#allocation2 + $0x18] sm:$0xff] %v321
      %324 = vrot.lane.b32.xlu0 %v297, 10
      %v325 = vpop.permute.xlu0 %324
      %326 = vrot.lane.b32.xlu0 %v298, 10
      %v327 = vpop.permute.xlu0 %326
      %s328 = scalar_lea.vmem %s5, 2
      %v329 = vld [vmem:[%s328] sm:$0x1]
      %v331 = vperm.slane %v329, 0
      %v333 = vmul.f32 %v325, %v331
      %v334 = vmul.f32 %v327, %v331
      %335 = vst [vmem:[#allocation2 + $0x20] sm:$0xff] %v333
      %336 = vst [vmem:[#allocation2 + $0x28] sm:$0xff] %v334
      %337 = vrot.lane.b32.xlu0 %v297, 9
      %v338 = vpop.permute.xlu0 %337
      %339 = vrot.lane.b32.xlu0 %v298, 9
      %v340 = vpop.permute.xlu0 %339
      %s341 = scalar_lea.vmem %s5, 3
      %v342 = vld [vmem:[%s341] sm:$0x1]
      %v344 = vperm.slane %v342, 0
      %v346 = vmul.f32 %v338, %v344
      %v347 = vmul.f32 %v340, %v344
      %348 = vst [vmem:[#allocation2 + $0x30] sm:$0xff] %v346
      %349 = vst [vmem:[#allocation2 + $0x38] sm:$0xff] %v347
      %350 = vrot.lane.b32.xlu0 %v297, 8
      %v351 = vpop.permute.xlu0 %350
      %352 = vrot.lane.b32.xlu0 %v298, 8
      %v353 = vpop.permute.xlu0 %352
      %s354 = scalar_lea.vmem %s5, 4
      %v355 = vld [vmem:[%s354] sm:$0x1]
      %v357 = vperm.slane %v355, 0
      %v359 = vmul.f32 %v351, %v357
      %v360 = vmul.f32 %v353, %v357
      %361 = vst [vmem:[#allocation2 + $0x40] sm:$0xff] %v359
      %362 = vst [vmem:[#allocation2 + $0x48] sm:$0xff] %v360
      %363 = vrot.lane.b32.xlu0 %v297, 7
      %v364 = vpop.permute.xlu0 %363
      %365 = vrot.lane.b32.xlu0 %v298, 7
      %v366 = vpop.permute.xlu0 %365
      %s367 = scalar_lea.vmem %s5, 5
      %v368 = vld [vmem:[%s367] sm:$0x1]
      %v370 = vperm.slane %v368, 0
      %v372 = vmul.f32 %v364, %v370
      %v373 = vmul.f32 %v366, %v370
      %374 = vst [vmem:[#allocation2 + $0x50] sm:$0xff] %v372
      %375 = vst [vmem:[#allocation2 + $0x58] sm:$0xff] %v373
      %376 = vrot.lane.b32.xlu0 %v297, 6
      %v377 = vpop.permute.xlu0 %376
      %378 = vrot.lane.b32.xlu0 %v298, 6
      %v379 = vpop.permute.xlu0 %378
      %s380 = scalar_lea.vmem %s5, 6
      %v381 = vld [vmem:[%s380] sm:$0x1]
      %v383 = vperm.slane %v381, 0
      %v385 = vmul.f32 %v377, %v383
      %v386 = vmul.f32 %v379, %v383
      %387 = vst [vmem:[#allocation2 + $0x60] sm:$0xff] %v385
      %388 = vst [vmem:[#allocation2 + $0x68] sm:$0xff] %v386
      %389 = vrot.lane.b32.xlu0 %v297, 5
      %v390 = vpop.permute.xlu0 %389
      %391 = vrot.lane.b32.xlu0 %v298, 5
      %v392 = vpop.permute.xlu0 %391
      %s393 = scalar_lea.vmem %s5, 7
      %v394 = vld [vmem:[%s393] sm:$0x1]
      %v396 = vperm.slane %v394, 0
      %v398 = vmul.f32 %v390, %v396
      %v399 = vmul.f32 %v392, %v396
      %400 = vst [vmem:[#allocation2 + $0x70] sm:$0xff] %v398
      %401 = vst [vmem:[#allocation2 + $0x78] sm:$0xff] %v399
      %402 = vrot.lane.b32.xlu0 %v297, 4
      %v403 = vpop.permute.xlu0 %402
      %404 = vrot.lane.b32.xlu0 %v298, 4
      %v405 = vpop.permute.xlu0 %404
      %s406 = scalar_lea.vmem %s5, 8
      %v407 = vld [vmem:[%s406] sm:$0x1]
      %v409 = vperm.slane %v407, 0
      %v411 = vmul.f32 %v403, %v409
      %v412 = vmul.f32 %v405, %v409
      %413 = vst [vmem:[#allocation2 + $0x80] sm:$0xff] %v411
      %414 = vst [vmem:[#allocation2 + $0x88] sm:$0xff] %v412
      %415 = vrot.lane.b32.xlu0 %v297, 3
      %v416 = vpop.permute.xlu0 %415
      %417 = vrot.lane.b32.xlu0 %v298, 3
      %v418 = vpop.permute.xlu0 %417
      %s419 = scalar_lea.vmem %s5, 9
      %v420 = vld [vmem:[%s419] sm:$0x1]
      %v422 = vperm.slane %v420, 0
      %v424 = vmul.f32 %v416, %v422
      %v425 = vmul.f32 %v418, %v422
      %426 = vst [vmem:[#allocation2 + $0x90] sm:$0xff] %v424
      %427 = vst [vmem:[#allocation2 + $0x98] sm:$0xff] %v425
      %428 = vrot.lane.b32.xlu0 %v297, 2
      %v429 = vpop.permute.xlu0 %428
      %430 = vrot.lane.b32.xlu0 %v298, 2
      %v431 = vpop.permute.xlu0 %430
      %s432 = scalar_lea.vmem %s5, 10
      %v433 = vld [vmem:[%s432] sm:$0x1]
      %v435 = vperm.slane %v433, 0
      %v437 = vmul.f32 %v429, %v435
      %v438 = vmul.f32 %v431, %v435
      %439 = vst [vmem:[#allocation2 + $0xa0] sm:$0xff] %v437
      %440 = vst [vmem:[#allocation2 + $0xa8] sm:$0xff] %v438
      %441 = vrot.lane.b32.xlu0 %v297, 1
      %v442 = vpop.permute.xlu0 %441
      %443 = vrot.lane.b32.xlu0 %v298, 1
      %v444 = vpop.permute.xlu0 %443
      %s445 = scalar_lea.vmem %s5, 11
      %v446 = vld [vmem:[%s445] sm:$0x1]
      %v448 = vperm.slane %v446, 0
      %v450 = vmul.f32 %v442, %v448
      %v451 = vmul.f32 %v444, %v448
      %452 = vst [vmem:[#allocation2 + $0xb0] sm:$0xff] %v450
      %453 = vst [vmem:[#allocation2 + $0xb8] sm:$0xff] %v451
      %s454 = scalar_lea.vmem %s5, 12
      %v455 = vld [vmem:[%s454] sm:$0x1]
      %v457 = vperm.slane %v455, 0
      %v459 = vmul.f32 %v297, %v457
      %v460 = vmul.f32 %v298, %v457
      %461 = vst [vmem:[#allocation2 + $0xc0] sm:$0xff] %v459
      %462 = vst [vmem:[#allocation2 + $0xc8] sm:$0xff] %v460
      %463 = vrot.lane.b32.xlu0 %v297, 127
      %v464 = vpop.permute.xlu0 %463
      %465 = vrot.lane.b32.xlu0 %v298, 127
      %v466 = vpop.permute.xlu0 %465
      %s467 = scalar_lea.vmem %s5, 13
      %v468 = vld [vmem:[%s467] sm:$0x1]
      %v470 = vperm.slane %v468, 0
      %v472 = vmul.f32 %v464, %v470
      %v473 = vmul.f32 %v466, %v470
      %474 = vst [vmem:[#allocation2 + $0xd0] sm:$0xff] %v472
      %475 = vst [vmem:[#allocation2 + $0xd8] sm:$0xff] %v473
      %476 = vrot.lane.b32.xlu0 %v297, 126
      %v477 = vpop.permute.xlu0 %476
      %478 = vrot.lane.b32.xlu0 %v298, 126
      %v479 = vpop.permute.xlu0 %478
      %s480 = scalar_lea.vmem %s5, 14
      %v481 = vld [vmem:[%s480] sm:$0x1]
      %v483 = vperm.slane %v481, 0
      %v485 = vmul.f32 %v477, %v483
      %v486 = vmul.f32 %v479, %v483
      %487 = vst [vmem:[#allocation2 + $0xe0] sm:$0xff] %v485
      %488 = vst [vmem:[#allocation2 + $0xe8] sm:$0xff] %v486
      %489 = vrot.lane.b32.xlu0 %v297, 125
      %v490 = vpop.permute.xlu0 %489
      %491 = vrot.lane.b32.xlu0 %v298, 125
      %v492 = vpop.permute.xlu0 %491
      %s493 = scalar_lea.vmem %s5, 15
      %v494 = vld [vmem:[%s493] sm:$0x1]
      %v496 = vperm.slane %v494, 0
      %v498 = vmul.f32 %v490, %v496
      %v499 = vmul.f32 %v492, %v496
      %500 = vst [vmem:[#allocation2 + $0xf0] sm:$0xff] %v498
      %501 = vst [vmem:[#allocation2 + $0xf8] sm:$0xff] %v499
      %502 = vrot.lane.b32.xlu0 %v297, 124
      %v503 = vpop.permute.xlu0 %502
      %504 = vrot.lane.b32.xlu0 %v298, 124
      %v505 = vpop.permute.xlu0 %504
      %s506 = scalar_lea.vmem %s5, 16
      %v507 = vld [vmem:[%s506] sm:$0x1]
      %v509 = vperm.slane %v507, 0
      %v511 = vmul.f32 %v503, %v509
      %v512 = vmul.f32 %v505, %v509
      %513 = vst [vmem:[#allocation2 + $0x100] sm:$0xff] %v511
      %514 = vst [vmem:[#allocation2 + $0x108] sm:$0xff] %v512
      %515 = vrot.lane.b32.xlu0 %v297, 123
      %v516 = vpop.permute.xlu0 %515
      %517 = vrot.lane.b32.xlu0 %v298, 123
      %v518 = vpop.permute.xlu0 %517
      %s519 = scalar_lea.vmem %s5, 17
      %v520 = vld [vmem:[%s519] sm:$0x1]
      %v522 = vperm.slane %v520, 0
      %v524 = vmul.f32 %v516, %v522
      %v525 = vmul.f32 %v518, %v522
      %526 = vst [vmem:[#allocation2 + $0x110] sm:$0xff] %v524
      %527 = vst [vmem:[#allocation2 + $0x118] sm:$0xff] %v525
      %528 = vrot.lane.b32.xlu0 %v297, 122
      %v529 = vpop.permute.xlu0 %528
      %530 = vrot.lane.b32.xlu0 %v298, 122
      %v531 = vpop.permute.xlu0 %530
      %s532 = scalar_lea.vmem %s5, 18
      %v533 = vld [vmem:[%s532] sm:$0x1]
      %v535 = vperm.slane %v533, 0
      %v537 = vmul.f32 %v529, %v535
      %v538 = vmul.f32 %v531, %v535
      %539 = vst [vmem:[#allocation2 + $0x120] sm:$0xff] %v537
      %540 = vst [vmem:[#allocation2 + $0x128] sm:$0xff] %v538
      %541 = vrot.lane.b32.xlu0 %v297, 121
      %v542 = vpop.permute.xlu0 %541
      %543 = vrot.lane.b32.xlu0 %v298, 121
      %v544 = vpop.permute.xlu0 %543
      %s545 = scalar_lea.vmem %s5, 19
      %v546 = vld [vmem:[%s545] sm:$0x1]
      %v548 = vperm.slane %v546, 0
      %v550 = vmul.f32 %v542, %v548
      %v551 = vmul.f32 %v544, %v548
      %552 = vst [vmem:[#allocation2 + $0x130] sm:$0xff] %v550
      %553 = vst [vmem:[#allocation2 + $0x138] sm:$0xff] %v551
      %554 = vrot.lane.b32.xlu0 %v297, 120
      %v555 = vpop.permute.xlu0 %554
      %556 = vrot.lane.b32.xlu0 %v298, 120
      %v557 = vpop.permute.xlu0 %556
      %s558 = scalar_lea.vmem %s5, 20
      %v559 = vld [vmem:[%s558] sm:$0x1]
      %v561 = vperm.slane %v559, 0
      %v563 = vmul.f32 %v555, %v561
      %v564 = vmul.f32 %v557, %v561
      %565 = vst [vmem:[#allocation2 + $0x140] sm:$0xff] %v563
      %566 = vst [vmem:[#allocation2 + $0x148] sm:$0xff] %v564
      %567 = vrot.lane.b32.xlu0 %v297, 119
      %v568 = vpop.permute.xlu0 %567
      %569 = vrot.lane.b32.xlu0 %v298, 119
      %v570 = vpop.permute.xlu0 %569
      %s571 = scalar_lea.vmem %s5, 21
      %v572 = vld [vmem:[%s571] sm:$0x1]
      %v574 = vperm.slane %v572, 0
      %v576 = vmul.f32 %v568, %v574
      %v577 = vmul.f32 %v570, %v574
      %578 = vst [vmem:[#allocation2 + $0x150] sm:$0xff] %v576
      %579 = vst [vmem:[#allocation2 + $0x158] sm:$0xff] %v577
      %580 = vrot.lane.b32.xlu0 %v297, 118
      %v581 = vpop.permute.xlu0 %580
      %582 = vrot.lane.b32.xlu0 %v298, 118
      %v583 = vpop.permute.xlu0 %582
      %s584 = scalar_lea.vmem %s5, 22
      %v585 = vld [vmem:[%s584] sm:$0x1]
      %v587 = vperm.slane %v585, 0
      %v589 = vmul.f32 %v581, %v587
      %v590 = vmul.f32 %v583, %v587
      %591 = vst [vmem:[#allocation2 + $0x160] sm:$0xff] %v589
      %592 = vst [vmem:[#allocation2 + $0x168] sm:$0xff] %v590
      %593 = vrot.lane.b32.xlu0 %v297, 117
      %v594 = vpop.permute.xlu0 %593
      %595 = vrot.lane.b32.xlu0 %v298, 117
      %v596 = vpop.permute.xlu0 %595
      %s597 = scalar_lea.vmem %s5, 23
      %v598 = vld [vmem:[%s597] sm:$0x1]
      %v600 = vperm.slane %v598, 0
      %v602 = vmul.f32 %v594, %v600
      %v603 = vmul.f32 %v596, %v600
      %604 = vst [vmem:[#allocation2 + $0x170] sm:$0xff] %v602
      %605 = vst [vmem:[#allocation2 + $0x178] sm:$0xff] %v603
      %606 = vrot.lane.b32.xlu0 %v297, 116
      %v607 = vpop.permute.xlu0 %606
      %608 = vrot.lane.b32.xlu0 %v298, 116
      %v609 = vpop.permute.xlu0 %608
      %s610 = scalar_lea.vmem %s5, 24
      %v611 = vld [vmem:[%s610] sm:$0x1]
      %v613 = vperm.slane %v611, 0
      %v615 = vmul.f32 %v607, %v613
      %v616 = vmul.f32 %v609, %v613
      %617 = vst [vmem:[#allocation2 + $0x180] sm:$0xff] %v615
      %618 = vst [vmem:[#allocation2 + $0x188] sm:$0xff] %v616
      %v619 = vld [vmem:[%s4] sm:$0xff]
      %v620 = vld [vmem:[%s4 + $0x8] sm:$0xff]
      %v621 = vld [vmem:[#allocation2] sm:$0xff]
      %v622 = vld [vmem:[#allocation2 + $0x8] sm:$0xff]
      %v623 = vld [vmem:[#allocation2 + $0x10] sm:$0xff]
      %v624 = vld [vmem:[#allocation2 + $0x18] sm:$0xff]
      %v625 = vld [vmem:[#allocation2 + $0x20] sm:$0xff]
      %v626 = vld [vmem:[#allocation2 + $0x28] sm:$0xff]
      %v627 = vld [vmem:[#allocation2 + $0x30] sm:$0xff]
      %v628 = vld [vmem:[#allocation2 + $0x38] sm:$0xff]
      %v629 = vld [vmem:[#allocation2 + $0x40] sm:$0xff]
      %v630 = vld [vmem:[#allocation2 + $0x48] sm:$0xff]
      %v631 = vld [vmem:[#allocation2 + $0x50] sm:$0xff]
      %v632 = vld [vmem:[#allocation2 + $0x58] sm:$0xff]
      %v633 = vld [vmem:[#allocation2 + $0x60] sm:$0xff]
      %v634 = vld [vmem:[#allocation2 + $0x68] sm:$0xff]
      %v635 = vld [vmem:[#allocation2 + $0x70] sm:$0xff]
      %v636 = vld [vmem:[#allocation2 + $0x78] sm:$0xff]
      %v637 = vld [vmem:[#allocation2 + $0x80] sm:$0xff]
      %v638 = vld [vmem:[#allocation2 + $0x88] sm:$0xff]
      %v639 = vld [vmem:[#allocation2 + $0x90] sm:$0xff]
      %v640 = vld [vmem:[#allocation2 + $0x98] sm:$0xff]
      %v641 = vld [vmem:[#allocation2 + $0xa0] sm:$0xff]
      %v642 = vld [vmem:[#allocation2 + $0xa8] sm:$0xff]
      %v643 = vld [vmem:[#allocation2 + $0xb0] sm:$0xff]
      %v644 = vld [vmem:[#allocation2 + $0xb8] sm:$0xff]
      %v645 = vld [vmem:[#allocation2 + $0xc0] sm:$0xff]
      %v646 = vld [vmem:[#allocation2 + $0xc8] sm:$0xff]
      %v647 = vld [vmem:[#allocation2 + $0xd0] sm:$0xff]
      %v648 = vld [vmem:[#allocation2 + $0xd8] sm:$0xff]
      %v649 = vld [vmem:[#allocation2 + $0xe0] sm:$0xff]
      %v650 = vld [vmem:[#allocation2 + $0xe8] sm:$0xff]
      %v651 = vld [vmem:[#allocation2 + $0xf0] sm:$0xff]
      %v652 = vld [vmem:[#allocation2 + $0xf8] sm:$0xff]
      %v653 = vld [vmem:[#allocation2 + $0x100] sm:$0xff]
      %v654 = vld [vmem:[#allocation2 + $0x108] sm:$0xff]
      %v655 = vld [vmem:[#allocation2 + $0x110] sm:$0xff]
      %v656 = vld [vmem:[#allocation2 + $0x118] sm:$0xff]
      %v657 = vld [vmem:[#allocation2 + $0x120] sm:$0xff]
      %v658 = vld [vmem:[#allocation2 + $0x128] sm:$0xff]
      %v659 = vld [vmem:[#allocation2 + $0x130] sm:$0xff]
      %v660 = vld [vmem:[#allocation2 + $0x138] sm:$0xff]
      %v661 = vld [vmem:[#allocation2 + $0x140] sm:$0xff]
      %v662 = vld [vmem:[#allocation2 + $0x148] sm:$0xff]
      %v663 = vld [vmem:[#allocation2 + $0x150] sm:$0xff]
      %v664 = vld [vmem:[#allocation2 + $0x158] sm:$0xff]
      %v665 = vld [vmem:[#allocation2 + $0x160] sm:$0xff]
      %v666 = vld [vmem:[#allocation2 + $0x168] sm:$0xff]
      %v667 = vld [vmem:[#allocation2 + $0x170] sm:$0xff]
      %v668 = vld [vmem:[#allocation2 + $0x178] sm:$0xff]
      %v669 = vld [vmem:[#allocation2 + $0x180] sm:$0xff]
      %v670 = vld [vmem:[#allocation2 + $0x188] sm:$0xff]
      %673 = vst [vmem:[#allocation1] ss:$2 sm:$0xff] %v619
      %s674 = scalar_lea.vmem [#allocation1], 16
      %675 = vst [vmem:[%s674] ss:$2 sm:$0xff] %v620
      %v676 = vld.sshfl [vmem:[#allocation1] sm:$0xff pattern:$0x75316420]
      %v677 = vld.sshfl [vmem:[#allocation1 + $0x8] sm:$0xff pattern:$0x75316420]
      %v678 = vld.sshfl [vmem:[#allocation1 + $0x10] sm:$0xff pattern:$0x75316420]
      %v679 = vld.sshfl [vmem:[#allocation1 + $0x18] sm:$0xff pattern:$0x75316420]
      %vm683 = vcmask 130048
      %v684 = vsel %vm683, %v679, 0
      %686 = vmatpush.msra.mxu0 %v636
      %687 = vmatpush.msra.mxu0 %v635
      %688 = vmatpush.msra.mxu0 %v634
      %689 = vmatpush.msra.mxu0 %v633
      %690 = vmatpush.msra.mxu0 %v632
      %691 = vmatpush.msra.mxu0 %v631
      %692 = vmatpush.msra.mxu0 %v630
      %693 = vmatpush.msra.mxu0 %v629
      %694 = vmatpush.msra.mxu0 %v628
      %695 = vmatpush.msra.mxu0 %v627
      %696 = vmatpush.msra.mxu0 %v626
      %697 = vmatpush.msra.mxu0 %v625
      %698 = vmatpush.msra.mxu0 %v624
      %699 = vmatpush.msra.mxu0 %v623
      %700 = vmatpush.msra.mxu0 %v622
      %701 = vmatpush.msra.mxu0 %v621
      %702 = vmatmul.f32.gmra.mxu0 %v676
      %v703 = vpop.f32.mrf.mxu0
      %v704 = vadd.f32 0.0, %v703
      %705 = vdwg.mxu0
      %706 = vmatpush.msra.mxu0 %v652
      %707 = vmatpush.msra.mxu0 %v651
      %708 = vmatpush.msra.mxu0 %v650
      %709 = vmatpush.msra.mxu0 %v649
      %710 = vmatpush.msra.mxu0 %v648
      %711 = vmatpush.msra.mxu0 %v647
      %712 = vmatpush.msra.mxu0 %v646
      %713 = vmatpush.msra.mxu0 %v645
      %714 = vmatpush.msra.mxu0 %v644
      %715 = vmatpush.msra.mxu0 %v643
      %716 = vmatpush.msra.mxu0 %v642
      %717 = vmatpush.msra.mxu0 %v641
      %718 = vmatpush.msra.mxu0 %v640
      %719 = vmatpush.msra.mxu0 %v639
      %720 = vmatpush.msra.mxu0 %v638
      %721 = vmatpush.msra.mxu0 %v637
      %722 = vmatmul.f32.gmra.mxu0 %v677
      %v723 = vpop.f32.mrf.mxu0
      %v724 = vadd.f32 %v704, %v723
      %725 = vdwg.mxu0
      %726 = vmatpush.msra.mxu0 %v668
      %727 = vmatpush.msra.mxu0 %v667
      %728 = vmatpush.msra.mxu0 %v666
      %729 = vmatpush.msra.mxu0 %v665
      %730 = vmatpush.msra.mxu0 %v664
      %731 = vmatpush.msra.mxu0 %v663
      %732 = vmatpush.msra.mxu0 %v662
      %733 = vmatpush.msra.mxu0 %v661
      %734 = vmatpush.msra.mxu0 %v660
      %735 = vmatpush.msra.mxu0 %v659
      %736 = vmatpush.msra.mxu0 %v658
      %737 = vmatpush.msra.mxu0 %v657
      %738 = vmatpush.msra.mxu0 %v656
      %739 = vmatpush.msra.mxu0 %v655
      %740 = vmatpush.msra.mxu0 %v654
      %741 = vmatpush.msra.mxu0 %v653
      %742 = vmatmul.f32.gmra.mxu0 %v678
      %v743 = vpop.f32.mrf.mxu0
      %v744 = vadd.f32 %v724, %v743
      %745 = vdwg.mxu0
      %746 = vmatpush.msra.mxu0 0.0
      %747 = vmatpush.msra.mxu0 0.0
      %748 = vmatpush.msra.mxu0 0.0
      %749 = vmatpush.msra.mxu0 0.0
      %750 = vmatpush.msra.mxu0 0.0
      %751 = vmatpush.msra.mxu0 0.0
      %752 = vmatpush.msra.mxu0 0.0
      %753 = vmatpush.msra.mxu0 0.0
      %754 = vmatpush.msra.mxu0 0.0
      %755 = vmatpush.msra.mxu0 0.0
      %756 = vmatpush.msra.mxu0 0.0
      %757 = vmatpush.msra.mxu0 0.0
      %758 = vmatpush.msra.mxu0 0.0
      %759 = vmatpush.msra.mxu0 0.0
      %760 = vmatpush.msra.mxu0 %v670
      %761 = vmatpush.msra.mxu0 %v669
      %762 = vmatmul.f32.gmra.mxu0 %v684
      %v763 = vpop.f32.mrf.mxu0
      %v764 = vadd.f32 %v744, %v763
      %765 = vdwg.mxu0
      %v766 = vld [vmem:[%s257] sm:$0xf]
      %767 = vst [vmem:[%s266] sm:$0xf] %v766
      %768 = vst [vmem:[%s266 + $0x4] sm:$0xf] %v764
      %p769 = scmp.lt.s32.totalorder %s17, 1
      %s770 = scalar_select %p769, %s17, 1
      %s771 = smul.addr %s770, 8
      %s772 = scalar_lea.vmem %s6, %s771
      // Predicated region
      $region45: #{bottleneck_forward.3} parent=43 // pred_check
        %p773 = pneg %p171
      $region46: #{bottleneck_forward.3} parent=43 // pred_check_branch
        %775 = sbr.rel (%p773) target = $region48
      $region47: #{bottleneck_forward.3} parent=43 // pred_region
        _
      $region48: #{bottleneck_forward.3} parent=43 // pred_fallthru
        _
    $region44: #{bottleneck_forward.3} parent=5 // pred_fallthru
      _
    %p776 = scmp.le.s32.totalorder 2, %s12
    // Predicated region
    $region49: #{bottleneck_forward.3} parent=5 // pred_check
      %p777 = pneg %p776
    $region50: #{bottleneck_forward.3} parent=5 // pred_check_branch
      %779 = sbr.rel (%p777) target = $region52
    $region51: #{bottleneck_forward.3} parent=5 // pred_region
      %s780 = ssub.s32 %s12, 2
      // Predicated region
      $region53: #{bottleneck_forward.3} parent=51 // pred_check
        %p781 = pneg %p177
      $region54: #{bottleneck_forward.3} parent=51 // pred_check_branch
        %783 = sbr.rel (%p781) target = $region56
      $region55: #{bottleneck_forward.3} parent=51 // pred_region
        %p784 = scmp.lt.s32.totalorder %s18, 1
        %s785 = scalar_select %p784, %s18, 1
        %s786 = smul.addr %s785, 8
        %s787 = scalar_lea.vmem %s6, %s786
      $region56: #{bottleneck_forward.3} parent=51 // pred_fallthru
        _
    $region52: #{bottleneck_forward.3} parent=5 // pred_fallthru
      _
  $region6: #{bottleneck_forward.3} parent=0 // loop_footer
    %s16 = sadd.s32 1, %s12
  $region7: #{bottleneck_forward.3} parent=0 // loop_footer_branch
    %11 = sbr.rel target = $region3
  $region8: #{bottleneck_forward.3} parent=0 // loop_exit
    _

</llo_original>
